<compile_context>
chip_gen: v6e
topology: v6e:2x2x1
jax: 0.10.0
libtpu: 0.0.40
codegen_flags: <defaults>
</compile_context>

<pallas_src>
import jax
import jax.numpy as jnp
from jax.experimental import pallas as pl
from jax.experimental.pallas import tpu as pltpu


# --------------------------------------------------------------------------
# helpers
# --------------------------------------------------------------------------
def _round_up(x, m):
    return ((x + m - 1) // m) * m


def _pad_to(a, shape):
    pads = [(0, s - d) for d, s in zip(a.shape, shape)]
    return jnp.pad(a, pads)


# --------------------------------------------------------------------------
# kernel: (optional) mean over the embedding list + fused 3-layer MLP
# --------------------------------------------------------------------------
def _make_decoder_kernel(n_emb, mean_first):
    """Builds a kernel with signature:
       (emb_0..emb_{n-1}, w1, b1, w2, b2, w3, b3, out_0..out_{m-1})
    where m == 1 if mean_first else n_emb.  Each emb tile is (tile_m, E),
    each out tile is (tile_m, Dp)."""
    inv_n = 1.0 / n_emb

    def kernel(*refs):
        emb_refs = refs[:n_emb]
        w1, b1, w2, b2, w3, b3 = refs[n_emb:n_emb + 6]
        out_refs = refs[n_emb + 6:]

        def mlp(x_bf16, o_ref):
            h = jnp.dot(x_bf16, w1[...], preferred_element_type=jnp.float32)
            h = jnp.maximum(h + b1[...], 0.0)                      # Linear+ReLU
            h = jnp.dot(h.astype(jnp.bfloat16), w2[...],
                        preferred_element_type=jnp.float32)
            h = jnp.maximum(h + b2[...], 0.0)                      # Linear+ReLU
            h = jnp.dot(h.astype(jnp.bfloat16), w3[...],
                        preferred_element_type=jnp.float32)
            o_ref[...] = (h + b3[...]).astype(o_ref.dtype)         # final Linear

        if mean_first and n_emb > 1:
            # f32 mean of the N separately-DMA'd tiles (no wrapper stack copy).
            acc = emb_refs[0][...].astype(jnp.float32)
            for r in emb_refs[1:]:
                acc = acc + r[...].astype(jnp.float32)
            mlp((acc * inv_n).astype(jnp.bfloat16), out_refs[0])
        else:
            # Fast path (N==1 mean, or per-embedding decode): feed bf16 tiles
            # straight into the first MXU dot — no f32 intermediates.
            for r, o in zip(emb_refs, out_refs):
                mlp(r[...].astype(jnp.bfloat16), o)

    return kernel


def _build_decoder_call(n_emb, mean_first, M, E, Hp, Dp, tile_m,
                        out_dtype, weight_pipeline_mode):
    n_out = 1 if mean_first else n_emb
    kernel = _make_decoder_kernel(n_emb, mean_first)

    wkw = {} if weight_pipeline_mode is None else {
        "pipeline_mode": weight_pipeline_mode}
    const = lambda i: (0, 0)
    emb_spec = pl.BlockSpec((tile_m, E), lambda i: (i, 0))
    out_spec = pl.BlockSpec((tile_m, Dp), lambda i: (i, 0))

    in_specs = [emb_spec] * n_emb + [
        # weights / biases: full-array blocks, constant index_map => resident
        # in VMEM across every grid step (no re-DMA).
        pl.BlockSpec((E, Hp), const, **wkw),
        pl.BlockSpec((1, Hp), const, **wkw),
        pl.BlockSpec((Hp, Hp), const, **wkw),
        pl.BlockSpec((1, Hp), const, **wkw),
        pl.BlockSpec((Hp, Dp), const, **wkw),
        pl.BlockSpec((1, Dp), const, **wkw),
    ]

    return pl.pallas_call(
        kernel,
        out_shape=tuple(jax.ShapeDtypeStruct((M, Dp), out_dtype)
                        for _ in range(n_out)),
        grid=(pl.cdiv(M, tile_m),),        # edge row-block handled by masking
        in_specs=in_specs,
        out_specs=tuple(out_spec for _ in range(n_out)),
        compiler_params=pltpu.CompilerParams(
            dimension_semantics=("parallel",),
            # Tiles here are a few MiB at most; raise toward 64 MiB (v6e/v5e)
            # only if tile_m / hidden dims grow substantially.
            vmem_limit_bytes=32 * 1024 * 1024,
        ),
    )


# --------------------------------------------------------------------------
# plain-XLA path for launch-cost-dominated tiny problems
# --------------------------------------------------------------------------
def _xla_decoder_forward(embeddings, padded_params, D, mean_first):
    w1p, b1p, w2p, b2p, w3p, b3p = padded_params

    def mlp(x):
        h = jnp.maximum(jnp.dot(x.astype(jnp.bfloat16), w1p,
                                preferred_element_type=jnp.float32) + b1p, 0.0)
        h = jnp.maximum(jnp.dot(h.astype(jnp.bfloat16), w2p,
                                preferred_element_type=jnp.float32) + b2p, 0.0)
        out = jnp.dot(h.astype(jnp.bfloat16), w3p,
                      preferred_element_type=jnp.float32) + b3p
        return out[..., :D]

    if mean_first and len(embeddings) > 1:
        acc = embeddings[0].astype(jnp.float32)
        for e in embeddings[1:]:
            acc = acc + e.astype(jnp.float32)
        groups = [acc * (1.0 / len(embeddings))]
    else:
        groups = list(embeddings)
    return [mlp(g) for g in groups]


# --------------------------------------------------------------------------
# forward wrapper (DecoderBase.forward)
# --------------------------------------------------------------------------
def decoder_forward(embeddings, prepared_params, mean_first,
                    tile_m=1024, out_dtype=jnp.float32, xla_fallback_rows=0):
    """embeddings: list of (B, T, E) arrays.  Returns list of (B, T, D)."""
    padded_params, (E, H, D) = prepared_params
    w1p, b1p, w2p, b2p, w3p, b3p = padded_params
    Hp, Dp = w1p.shape[1], w3p.shape[1]

    n_emb = len(embeddings)
    B, T, Ein = embeddings[0].shape
    assert Ein == E
    for e in embeddings:
        assert e.shape == (B, T, E)
    M = B * T

    # Launch-cost fallback (set xla_fallback_rows ~4096 in production; kept at
    # 0 here so the demo always exercises the Pallas kernel).
    if M <= xla_fallback_rows:
        return _xla_decoder_forward(embeddings, padded_params, D, mean_first)

    # tile_m: multiple of 8, capped at ~M/2 so the grid has >= 2 steps and
    # both TensorCores run on v7x under dimension_semantics=("parallel",).
    tile_m = max(8, min(tile_m, _round_up(pl.cdiv(M, 2), 8)))

    flat = [e.reshape(M, E) for e in embeddings]   # trivial collapse, no copy
    args = (*flat, w1p, b1p, w2p, b2p, w3p, b3p)

    def run(weight_pipeline_mode):
        call = _build_decoder_call(n_emb, mean_first, M, E, Hp, Dp, tile_m,
                                   out_dtype, weight_pipeline_mode)
        return call(*args)

    try:
        # Constant-index weight blocks only need a single VMEM buffer; halves
        # the resident-weight footprint (important on v7x's 64 MiB VMEM when
        # hidden dims are large).
        outs = run(pl.Buffered(1))
    except Exception:
        # TODO(synk): this JAX build rejected pipeline_mode=Buffered(1);
        # default double-buffered weights are functionally identical.
        outs = run(None)

    return [o[:, :D].reshape(B, T, D) for o in outs]


# --------------------------------------------------------------------------
# parameters
# --------------------------------------------------------------------------
def init_params(key, embedding_dim, hidden, output_dim):
    """PyTorch nn.Linear-style init, stored transposed as (in, out)."""
    k1, k2, k3 = jax.random.split(key, 3)

    def linear(k, fan_in, fan_out):
        bound = 1.0 / jnp.sqrt(fan_in)
        kw, kb = jax.random.split(k)
        w = jax.random.uniform(kw, (fan_in, fan_out), jnp.float32, -bound, bound)
        b = jax.random.uniform(kb, (1, fan_out), jnp.float32, -bound, bound)
        return w, b

    w1, b1 = linear(k1, embedding_dim, hidden)
    w2, b2 = linear(k2, hidden, hidden)
    w3, b3 = linear(k3, hidden, output_dim)
    return (w1, b1, w2, b2, w3, b3)


def prepare_params(raw_params):
    """Zero-pad only the weight OUTPUT dims (H, D) to multiples of 128 for
    lane-dense intermediates/stores; the input dim E stays at its logical
    width so activations are streamed unpadded.  Padded rows/cols and biases
    are zero, so padding never leaks into real outputs.  Weights (MXU
    operands) are bf16; biases stay f32 for the epilogue."""
    w1, b1, w2, b2, w3, b3 = raw_params
    E, H = w1.shape
    D = w3.shape[1]
    Hp, Dp = _round_up(H, 128), _round_up(D, 128)
    padded = (
        _pad_to(w1, (E, Hp)).astype(jnp.bfloat16),
        _pad_to(b1, (1, Hp)),
        _pad_to(w2, (Hp, Hp)).astype(jnp.bfloat16),
        _pad_to(b2, (1, Hp)),
        _pad_to(w3, (Hp, Dp)).astype(jnp.bfloat16),
        _pad_to(b3, (1, Dp)),
    )
    return padded, (E, H, D)


# --------------------------------------------------------------------------
# plain-JAX reference mirroring the kernel math (f32 mean, bf16 dot operands)
# --------------------------------------------------------------------------
def reference_forward(embeddings, raw_params, mean_first):
    w1, b1, w2, b2, w3, b3 = raw_params

    def dot(x, w):
        return jnp.dot(x.astype(jnp.bfloat16), w.astype(jnp.bfloat16),
                       preferred_element_type=jnp.float32)

    def mlp(x):
        h = jnp.maximum(dot(x, w1) + b1, 0.0)
        h = jnp.maximum(dot(h, w2) + b2, 0.0)
        return dot(h, w3) + b3

    if mean_first:
        acc = embeddings[0].astype(jnp.float32)
        for e in embeddings[1:]:
            acc = acc + e.astype(jnp.float32)
        embeddings = [acc * (1.0 / len(embeddings))]
    return [mlp(e) for e in embeddings]


# --------------------------------------------------------------------------
# main
# --------------------------------------------------------------------------
if __name__ == "__main__":
    batch, seq = 2, 8
    embedding_dim, hidden, output_dim = 32, 32, 32
    num_embeddings = 3

    key = jax.random.PRNGKey(0)
    k_p, *k_es = jax.random.split(key, 1 + num_embeddings)
    embeddings = [
        jax.random.normal(k, (batch, seq, embedding_dim), dtype=jnp.float32)
        for k in k_es
    ]
    raw_params = init_params(k_p, embedding_dim, hidden, output_dim)
    prepared = prepare_params(raw_params)

    for mean_first in (True, False):
        outs = decoder_forward(embeddings, prepared, mean_first)
        outs = jax.block_until_ready(outs)
        refs = reference_forward(embeddings, raw_params, mean_first)

        expected_n = 1 if mean_first else num_embeddings
        assert len(outs) == expected_n
        for o, r in zip(outs, refs):
            assert o.shape == (batch, seq, output_dim)
            assert jnp.allclose(o, r, atol=2e-3, rtol=2e-3), (
                f"mismatch vs reference (mean_first={mean_first})")

    print("KERNEL_OK")
</pallas_src>

<mosaic_0001>
module attributes {stable_mosaic.version = 11 : i64} {
  func.func @kernel(%arg0: i32, %arg1: memref<8x32xf32, #tpu.memory_space<vmem>>, %arg2: memref<8x32xf32, #tpu.memory_space<vmem>>, %arg3: memref<8x32xf32, #tpu.memory_space<vmem>>, %arg4: memref<32x128xbf16, #tpu.memory_space<vmem>>, %arg5: memref<1x128xf32, #tpu.memory_space<vmem>>, %arg6: memref<128x128xbf16, #tpu.memory_space<vmem>>, %arg7: memref<1x128xf32, #tpu.memory_space<vmem>>, %arg8: memref<128x128xbf16, #tpu.memory_space<vmem>>, %arg9: memref<1x128xf32, #tpu.memory_space<vmem>>, %arg10: memref<8x128xf32, #tpu.memory_space<vmem>>) attributes {dimension_semantics = [#tpu.dimension_semantics<parallel>], iteration_bounds = array<i64: 2>, scalar_prefetch = 0 : i64, scratch_operands = 0 : i64, tpu.core_type = #tpu.core_type<tc>, window_params = [{transform_indices = @transform_0, window_bounds = array<i64: 8, 32>}, {transform_indices = @transform_1, window_bounds = array<i64: 8, 32>}, {transform_indices = @transform_2, window_bounds = array<i64: 8, 32>}, {pipeline_mode = #tpu.pipeline_mode<synchronous>, transform_indices = @transform_3, window_bounds = array<i64: 32, 128>}, {pipeline_mode = #tpu.pipeline_mode<synchronous>, transform_indices = @transform_4, window_bounds = array<i64: 1, 128>}, {pipeline_mode = #tpu.pipeline_mode<synchronous>, transform_indices = @transform_5, window_bounds = array<i64: 128, 128>}, {pipeline_mode = #tpu.pipeline_mode<synchronous>, transform_indices = @transform_6, window_bounds = array<i64: 1, 128>}, {pipeline_mode = #tpu.pipeline_mode<synchronous>, transform_indices = @transform_7, window_bounds = array<i64: 128, 128>}, {pipeline_mode = #tpu.pipeline_mode<synchronous>, transform_indices = @transform_8, window_bounds = array<i64: 1, 128>}, {transform_indices = @transform_9, window_bounds = array<i64: 8, 128>}]} {
    %c0 = arith.constant 0 : index
    %c0_0 = arith.constant 0 : index
    %0 = vector.load %arg1[%c0, %c0_0] : memref<8x32xf32, #tpu.memory_space<vmem>>, vector<8x32xf32>
    %c0_1 = arith.constant 0 : index
    %c0_2 = arith.constant 0 : index
    %1 = vector.load %arg2[%c0_1, %c0_2] : memref<8x32xf32, #tpu.memory_space<vmem>>, vector<8x32xf32>
    %2 = arith.addf %0, %1 : vector<8x32xf32>
    %c0_3 = arith.constant 0 : index
    %c0_4 = arith.constant 0 : index
    %3 = vector.load %arg3[%c0_3, %c0_4] : memref<8x32xf32, #tpu.memory_space<vmem>>, vector<8x32xf32>
    %4 = arith.addf %2, %3 : vector<8x32xf32>
    %cst = arith.constant 0.333333343 : f32
    %5 = vector.broadcast %cst : f32 to vector<8x32xf32>
    %6 = arith.mulf %4, %5 : vector<8x32xf32>
    %7 = arith.truncf %6 : vector<8x32xf32> to vector<8x32xbf16>
    %c0_5 = arith.constant 0 : index
    %c0_6 = arith.constant 0 : index
    %8 = vector.load %arg4[%c0_5, %c0_6] : memref<32x128xbf16, #tpu.memory_space<vmem>>, vector<32x128xbf16>
    %cst_7 = arith.constant dense<0.000000e+00> : vector<8x128xf32>
    %9 = tpu.matmul %7, %8, %cst_7 {dimension_numbers = #tpu.dot_dimension_numbers<[1], [0], [0], [1], [0, 0, 1, 1], [], []>} : vector<8x32xbf16>, vector<32x128xbf16>, vector<8x128xf32> -> vector<8x128xf32>
    %c0_8 = arith.constant 0 : index
    %c0_9 = arith.constant 0 : index
    %10 = vector.load %arg5[%c0_8, %c0_9] : memref<1x128xf32, #tpu.memory_space<vmem>>, vector<1x128xf32>
    %11 = vector.broadcast %10 : vector<1x128xf32> to vector<8x128xf32>
    %12 = arith.addf %9, %11 : vector<8x128xf32>
    %cst_10 = arith.constant 0.000000e+00 : f32
    %13 = vector.broadcast %cst_10 : f32 to vector<8x128xf32>
    %14 = arith.maximumf %12, %13 : vector<8x128xf32>
    %15 = arith.truncf %14 : vector<8x128xf32> to vector<8x128xbf16>
    %c0_11 = arith.constant 0 : index
    %c0_12 = arith.constant 0 : index
    %16 = vector.load %arg6[%c0_11, %c0_12] : memref<128x128xbf16, #tpu.memory_space<vmem>>, vector<128x128xbf16>
    %cst_13 = arith.constant dense<0.000000e+00> : vector<8x128xf32>
    %17 = tpu.matmul %15, %16, %cst_13 {dimension_numbers = #tpu.dot_dimension_numbers<[1], [0], [0], [1], [0, 0, 1, 1], [], []>} : vector<8x128xbf16>, vector<128x128xbf16>, vector<8x128xf32> -> vector<8x128xf32>
    %c0_14 = arith.constant 0 : index
    %c0_15 = arith.constant 0 : index
    %18 = vector.load %arg7[%c0_14, %c0_15] : memref<1x128xf32, #tpu.memory_space<vmem>>, vector<1x128xf32>
    %19 = vector.broadcast %18 : vector<1x128xf32> to vector<8x128xf32>
    %20 = arith.addf %17, %19 : vector<8x128xf32>
    %cst_16 = arith.constant 0.000000e+00 : f32
    %21 = vector.broadcast %cst_16 : f32 to vector<8x128xf32>
    %22 = arith.maximumf %20, %21 : vector<8x128xf32>
    %23 = arith.truncf %22 : vector<8x128xf32> to vector<8x128xbf16>
    %c0_17 = arith.constant 0 : index
    %c0_18 = arith.constant 0 : index
    %24 = vector.load %arg8[%c0_17, %c0_18] : memref<128x128xbf16, #tpu.memory_space<vmem>>, vector<128x128xbf16>
    %cst_19 = arith.constant dense<0.000000e+00> : vector<8x128xf32>
    %25 = tpu.matmul %23, %24, %cst_19 {dimension_numbers = #tpu.dot_dimension_numbers<[1], [0], [0], [1], [0, 0, 1, 1], [], []>} : vector<8x128xbf16>, vector<128x128xbf16>, vector<8x128xf32> -> vector<8x128xf32>
    %c0_20 = arith.constant 0 : index
    %c0_21 = arith.constant 0 : index
    %26 = vector.load %arg9[%c0_20, %c0_21] : memref<1x128xf32, #tpu.memory_space<vmem>>, vector<1x128xf32>
    %27 = vector.broadcast %26 : vector<1x128xf32> to vector<8x128xf32>
    %28 = arith.addf %25, %27 : vector<8x128xf32>
    %c0_22 = arith.constant 0 : index
    %c0_23 = arith.constant 0 : index
    %29 = vector.load %arg10[%c0_22, %c0_23] : memref<8x128xf32, #tpu.memory_space<vmem>>, vector<8x128xf32>
    tpu.vector_store %arg10[%c0_22, %c0_23], %28 {strides = array<i32>} : memref<8x128xf32, #tpu.memory_space<vmem>>, vector<8x128xf32>,
    return
  }
  func.func @transform_0(%arg0: i32) -> (i32, i32) {
    %c0_i32 = arith.constant 0 : i32
    %c0_i32_0 = arith.constant 0 : i32
    return %arg0, %c0_i32 : i32, i32
  }
  func.func @transform_1(%arg0: i32) -> (i32, i32) {
    %c0_i32 = arith.constant 0 : i32
    %c0_i32_0 = arith.constant 0 : i32
    return %arg0, %c0_i32 : i32, i32
  }
  func.func @transform_2(%arg0: i32) -> (i32, i32) {
    %c0_i32 = arith.constant 0 : i32
    %c0_i32_0 = arith.constant 0 : i32
    return %arg0, %c0_i32 : i32, i32
  }
  func.func @transform_3(%arg0: i32) -> (i32, i32) {
    %c0_i32 = arith.constant 0 : i32
    %c0_i32_0 = arith.constant 0 : i32
    %c0_i32_1 = arith.constant 0 : i32
    return %c0_i32, %c0_i32_0 : i32, i32
  }
  func.func @transform_4(%arg0: i32) -> (i32, i32) {
    %c0_i32 = arith.constant 0 : i32
    %c0_i32_0 = arith.constant 0 : i32
    %c0_i32_1 = arith.constant 0 : i32
    return %c0_i32, %c0_i32_0 : i32, i32
  }
  func.func @transform_5(%arg0: i32) -> (i32, i32) {
    %c0_i32 = arith.constant 0 : i32
    %c0_i32_0 = arith.constant 0 : i32
    %c0_i32_1 = arith.constant 0 : i32
    return %c0_i32, %c0_i32_0 : i32, i32
  }
  func.func @transform_6(%arg0: i32) -> (i32, i32) {
    %c0_i32 = arith.constant 0 : i32
    %c0_i32_0 = arith.constant 0 : i32
    %c0_i32_1 = arith.constant 0 : i32
    return %c0_i32, %c0_i32_0 : i32, i32
  }
  func.func @transform_7(%arg0: i32) -> (i32, i32) {
    %c0_i32 = arith.constant 0 : i32
    %c0_i32_0 = arith.constant 0 : i32
    %c0_i32_1 = arith.constant 0 : i32
    return %c0_i32, %c0_i32_0 : i32, i32
  }
  func.func @transform_8(%arg0: i32) -> (i32, i32) {
    %c0_i32 = arith.constant 0 : i32
    %c0_i32_0 = arith.constant 0 : i32
    %c0_i32_1 = arith.constant 0 : i32
    return %c0_i32, %c0_i32_0 : i32, i32
  }
  func.func @transform_9(%arg0: i32) -> (i32, i32) {
    %c0_i32 = arith.constant 0 : i32
    %c0_i32_0 = arith.constant 0 : i32
    return %arg0, %c0_i32 : i32, i32
  }
}

module attributes {stable_mosaic.version = 11 : i64} {
  func.func @kernel(%arg0: i32, %arg1: memref<8x32xf32, #tpu.memory_space<vmem>>, %arg2: memref<8x32xf32, #tpu.memory_space<vmem>>, %arg3: memref<8x32xf32, #tpu.memory_space<vmem>>, %arg4: memref<32x128xbf16, #tpu.memory_space<vmem>>, %arg5: memref<1x128xf32, #tpu.memory_space<vmem>>, %arg6: memref<128x128xbf16, #tpu.memory_space<vmem>>, %arg7: memref<1x128xf32, #tpu.memory_space<vmem>>, %arg8: memref<128x128xbf16, #tpu.memory_space<vmem>>, %arg9: memref<1x128xf32, #tpu.memory_space<vmem>>, %arg10: memref<8x128xf32, #tpu.memory_space<vmem>>) attributes {dimension_semantics = [#tpu.dimension_semantics<parallel>], iteration_bounds = array<i64: 2>, scalar_prefetch = 0 : i64, scratch_operands = 0 : i64, tpu.core_type = #tpu.core_type<tc>, window_params = [{transform_indices = @transform_0, window_bounds = array<i64: 8, 32>}, {transform_indices = @transform_1, window_bounds = array<i64: 8, 32>}, {transform_indices = @transform_2, window_bounds = array<i64: 8, 32>}, {pipeline_mode = #tpu.pipeline_mode<synchronous>, transform_indices = @transform_3, window_bounds = array<i64: 32, 128>}, {pipeline_mode = #tpu.pipeline_mode<synchronous>, transform_indices = @transform_4, window_bounds = array<i64: 1, 128>}, {pipeline_mode = #tpu.pipeline_mode<synchronous>, transform_indices = @transform_5, window_bounds = array<i64: 128, 128>}, {pipeline_mode = #tpu.pipeline_mode<synchronous>, transform_indices = @transform_6, window_bounds = array<i64: 1, 128>}, {pipeline_mode = #tpu.pipeline_mode<synchronous>, transform_indices = @transform_7, window_bounds = array<i64: 128, 128>}, {pipeline_mode = #tpu.pipeline_mode<synchronous>, transform_indices = @transform_8, window_bounds = array<i64: 1, 128>}, {transform_indices = @transform_9, window_bounds = array<i64: 8, 128>}]} {
    %c0 = arith.constant 0 : index
    %c0_0 = arith.constant 0 : index
    %0 = vector.load %arg1[%c0, %c0_0] : memref<8x32xf32, #tpu.memory_space<vmem>>, vector<8x32xf32>
    %c0_1 = arith.constant 0 : index
    %c0_2 = arith.constant 0 : index
    %1 = vector.load %arg2[%c0_1, %c0_2] : memref<8x32xf32, #tpu.memory_space<vmem>>, vector<8x32xf32>
    %2 = arith.addf %0, %1 : vector<8x32xf32>
    %c0_3 = arith.constant 0 : index
    %c0_4 = arith.constant 0 : index
    %3 = vector.load %arg3[%c0_3, %c0_4] : memref<8x32xf32, #tpu.memory_space<vmem>>, vector<8x32xf32>
    %4 = arith.addf %2, %3 : vector<8x32xf32>
    %cst = arith.constant 0.333333343 : f32
    %5 = vector.broadcast %cst : f32 to vector<8x32xf32>
    %6 = arith.mulf %4, %5 : vector<8x32xf32>
    %7 = arith.truncf %6 : vector<8x32xf32> to vector<8x32xbf16>
    %c0_5 = arith.constant 0 : index
    %c0_6 = arith.constant 0 : index
    %8 = vector.load %arg4[%c0_5, %c0_6] : memref<32x128xbf16, #tpu.memory_space<vmem>>, vector<32x128xbf16>
    %cst_7 = arith.constant dense<0.000000e+00> : vector<8x128xf32>
    %9 = tpu.matmul %7, %8, %cst_7 {dimension_numbers = #tpu.dot_dimension_numbers<[1], [0], [0], [1], [0, 0, 1, 1], [], []>} : vector<8x32xbf16>, vector<32x128xbf16>, vector<8x128xf32> -> vector<8x128xf32>
    %c0_8 = arith.constant 0 : index
    %c0_9 = arith.constant 0 : index
    %10 = vector.load %arg5[%c0_8, %c0_9] : memref<1x128xf32, #tpu.memory_space<vmem>>, vector<1x128xf32>
    %11 = vector.broadcast %10 : vector<1x128xf32> to vector<8x128xf32>
    %12 = arith.addf %9, %11 : vector<8x128xf32>
    %cst_10 = arith.constant 0.000000e+00 : f32
    %13 = vector.broadcast %cst_10 : f32 to vector<8x128xf32>
    %14 = arith.maximumf %12, %13 : vector<8x128xf32>
    %15 = arith.truncf %14 : vector<8x128xf32> to vector<8x128xbf16>
    %c0_11 = arith.constant 0 : index
    %c0_12 = arith.constant 0 : index
    %16 = vector.load %arg6[%c0_11, %c0_12] : memref<128x128xbf16, #tpu.memory_space<vmem>>, vector<128x128xbf16>
    %cst_13 = arith.constant dense<0.000000e+00> : vector<8x128xf32>
    %17 = tpu.matmul %15, %16, %cst_13 {dimension_numbers = #tpu.dot_dimension_numbers<[1], [0], [0], [1], [0, 0, 1, 1], [], []>} : vector<8x128xbf16>, vector<128x128xbf16>, vector<8x128xf32> -> vector<8x128xf32>
    %c0_14 = arith.constant 0 : index
    %c0_15 = arith.constant 0 : index
    %18 = vector.load %arg7[%c0_14, %c0_15] : memref<1x128xf32, #tpu.memory_space<vmem>>, vector<1x128xf32>
    %19 = vector.broadcast %18 : vector<1x128xf32> to vector<8x128xf32>
    %20 = arith.addf %17, %19 : vector<8x128xf32>
    %cst_16 = arith.constant 0.000000e+00 : f32
    %21 = vector.broadcast %cst_16 : f32 to vector<8x128xf32>
    %22 = arith.maximumf %20, %21 : vector<8x128xf32>
    %23 = arith.truncf %22 : vector<8x128xf32> to vector<8x128xbf16>
    %c0_17 = arith.constant 0 : index
    %c0_18 = arith.constant 0 : index
    %24 = vector.load %arg8[%c0_17, %c0_18] : memref<128x128xbf16, #tpu.memory_space<vmem>>, vector<128x128xbf16>
    %cst_19 = arith.constant dense<0.000000e+00> : vector<8x128xf32>
    %25 = tpu.matmul %23, %24, %cst_19 {dimension_numbers = #tpu.dot_dimension_numbers<[1], [0], [0], [1], [0, 0, 1, 1], [], []>} : vector<8x128xbf16>, vector<128x128xbf16>, vector<8x128xf32> -> vector<8x128xf32>
    %c0_20 = arith.constant 0 : index
    %c0_21 = arith.constant 0 : index
    %26 = vector.load %arg9[%c0_20, %c0_21] : memref<1x128xf32, #tpu.memory_space<vmem>>, vector<1x128xf32>
    %27 = vector.broadcast %26 : vector<1x128xf32> to vector<8x128xf32>
    %28 = arith.addf %25, %27 : vector<8x128xf32>
    %c0_22 = arith.constant 0 : index
    %c0_23 = arith.constant 0 : index
    %29 = vector.load %arg10[%c0_22, %c0_23] : memref<8x128xf32, #tpu.memory_space<vmem>>, vector<8x128xf32>
    tpu.vector_store %arg10[%c0_22, %c0_23], %28 {strides = array<i32>} : memref<8x128xf32, #tpu.memory_space<vmem>>, vector<8x128xf32>,
    return
  }
  func.func @transform_0(%arg0: i32) -> (i32, i32) {
    %c0_i32 = arith.constant 0 : i32
    %c0_i32_0 = arith.constant 0 : i32
    return %arg0, %c0_i32 : i32, i32
  }
  func.func @transform_1(%arg0: i32) -> (i32, i32) {
    %c0_i32 = arith.constant 0 : i32
    %c0_i32_0 = arith.constant 0 : i32
    return %arg0, %c0_i32 : i32, i32
  }
  func.func @transform_2(%arg0: i32) -> (i32, i32) {
    %c0_i32 = arith.constant 0 : i32
    %c0_i32_0 = arith.constant 0 : i32
    return %arg0, %c0_i32 : i32, i32
  }
  func.func @transform_3(%arg0: i32) -> (i32, i32) {
    %c0_i32 = arith.constant 0 : i32
    %c0_i32_0 = arith.constant 0 : i32
    %c0_i32_1 = arith.constant 0 : i32
    return %c0_i32, %c0_i32_0 : i32, i32
  }
  func.func @transform_4(%arg0: i32) -> (i32, i32) {
    %c0_i32 = arith.constant 0 : i32
    %c0_i32_0 = arith.constant 0 : i32
    %c0_i32_1 = arith.constant 0 : i32
    return %c0_i32, %c0_i32_0 : i32, i32
  }
  func.func @transform_5(%arg0: i32) -> (i32, i32) {
    %c0_i32 = arith.constant 0 : i32
    %c0_i32_0 = arith.constant 0 : i32
    %c0_i32_1 = arith.constant 0 : i32
    return %c0_i32, %c0_i32_0 : i32, i32
  }
  func.func @transform_6(%arg0: i32) -> (i32, i32) {
    %c0_i32 = arith.constant 0 : i32
    %c0_i32_0 = arith.constant 0 : i32
    %c0_i32_1 = arith.constant 0 : i32
    return %c0_i32, %c0_i32_0 : i32, i32
  }
  func.func @transform_7(%arg0: i32) -> (i32, i32) {
    %c0_i32 = arith.constant 0 : i32
    %c0_i32_0 = arith.constant 0 : i32
    %c0_i32_1 = arith.constant 0 : i32
    return %c0_i32, %c0_i32_0 : i32, i32
  }
  func.func @transform_8(%arg0: i32) -> (i32, i32) {
    %c0_i32 = arith.constant 0 : i32
    %c0_i32_0 = arith.constant 0 : i32
    %c0_i32_1 = arith.constant 0 : i32
    return %c0_i32, %c0_i32_0 : i32, i32
  }
  func.func @transform_9(%arg0: i32) -> (i32, i32) {
    %c0_i32 = arith.constant 0 : i32
    %c0_i32_0 = arith.constant 0 : i32
    return %arg0, %c0_i32 : i32, i32
  }
}

</mosaic_0001>

<llo_original>
// kernel: tpu_custom_call.1
$region0: #{tpu_custom_call.1}
  #allocation0 [shape = 'u32[]', space=smem, size = 0x4, offset = 0x4, fixed_abs, tag = 'smem constant byte address 0x4 - core index']
  #allocation1 [shape = 'u32[144,128]{1,0:T(1,128)}', space=vmem, size = 0x12000, scoped, tag = 'internal scratch']
  %s0 = inlined_call_operand.hbm [shape: f32[16,32], index: 0, kind: input, shape index: {}]
  %s1 = inlined_call_operand.hbm [shape: f32[16,32], index: 1, kind: input, shape index: {}]
  %s2 = inlined_call_operand.hbm [shape: f32[16,32], index: 2, kind: input, shape index: {}]
  %s3 = inlined_call_operand.hbm [shape: bf16[32,128], index: 3, kind: input, shape index: {}]
  %s4 = inlined_call_operand.vmem [shape: f32[1,128], index: 4, kind: input, shape index: {}]
  %s5 = inlined_call_operand.hbm [shape: bf16[128,128], index: 5, kind: input, shape index: {}]
  %s6 = inlined_call_operand.vmem [shape: f32[1,128], index: 6, kind: input, shape index: {}]
  %s7 = inlined_call_operand.hbm [shape: bf16[128,128], index: 7, kind: input, shape index: {}]
  %s8 = inlined_call_operand.vmem [shape: f32[1,128], index: 8, kind: input, shape index: {}]
  %s9 = inlined_call_operand.hbm [shape: f32[16,128], index: 9, kind: output, shape index: {}]
  %s10 = sld [smem:[#allocation0]]
  $region93: #{tpu_custom_call.1} parent=0
    _
  %s12 = ssub.s32 1, %s10
  %s13 = scalar_select 0, %s12, %s10
  $region1: #{tpu_custom_call.1} parent=0
    #allocation2 [shape = 'u8[8192]{0}', space=vmem, size = 0x2000, scoped, tag = 'input window, operand 0']
    #allocation3 [shape = 's32[2]{0}', space=sflag, size = 0x8, scoped, tag = 'scoped memory for tpu_custom_call.1']
    #allocation4 [shape = 's32[2]{0}', space=sflag, size = 0x8, scoped, tag = 'scoped memory for tpu_custom_call.1']
    #allocation5 [shape = 'u8[8192]{0}', space=vmem, size = 0x2000, scoped, tag = 'input window, operand 1']
    #allocation6 [shape = 's32[2]{0}', space=sflag, size = 0x8, scoped, tag = 'scoped memory for tpu_custom_call.1']
    #allocation7 [shape = 'u8[8192]{0}', space=vmem, size = 0x2000, scoped, tag = 'input window, operand 2']
    #allocation8 [shape = 'u8[8192]{0}', space=vmem, size = 0x2000, scoped, tag = 'input window, operand 3, single buffered']
    #allocation9 [shape = 's32[1]{0}', space=sflag, size = 0x4, scoped, tag = 'scoped memory for tpu_custom_call.1']
    #allocation10 [shape = 'u8[32768]{0}', space=vmem, size = 0x8000, scoped, tag = 'input window, operand 5, single buffered']
    #allocation11 [shape = 'u8[32768]{0}', space=vmem, size = 0x8000, scoped, tag = 'input window, operand 7, single buffered']
    #allocation12 [shape = 's32[1]{0}', space=sflag, size = 0x4, scoped, tag = 'scoped memory for tpu_custom_call.1']
    #allocation13 [shape = 'u8[8192]{0}', space=vmem, size = 0x2000, scoped, tag = 'output window, operand 0']
    %14 = vsyncpa [#allocation3], 0
    %s15 = scalar_lea.sflag [#allocation3], 1
    %16 = vsyncpa %s15, 0
    %17 = vsyncpa [#allocation6], 0
    %s18 = scalar_lea.sflag [#allocation6], 1
    %19 = vsyncpa %s18, 0
    %20 = vsyncpa [#allocation9], 0
    %21 = vsyncpa [#allocation12], 0
    %22 = vsyncpa [#allocation4], 0
    %s23 = scalar_lea.sflag [#allocation4], 1
    %24 = vsyncpa %s23, 0
    loop: start=0, step=1, limit=4
    $region2: #{tpu_custom_call.1} parent=1 // loop_pre_header
      _
    $region3: #{tpu_custom_call.1} parent=1 // loop_header
      %s26 = sphi 0, %s30
      %p27 = scmp.ge.s32.totalorder %s26, 4
      %s36 = sphi 0, %s38
      %s39 = sphi 0, %s36
      %s40 = sphi 0, %s39
      %s56 = sphi 0, %s40
      %s62 = sphi 0, %s64
      %s65 = sphi 0, %s62
      %s66 = sphi 0, %s65
      %s82 = sphi 0, %s66
      %s88 = sphi 0, %s90
      %s91 = sphi 0, %s88
      %s92 = sphi 0, %s91
      %s108 = sphi 0, %s92
      %s112 = sphi 0, %s112
      %s114 = sphi 0, %s112
      %s115 = sphi 0, %s114
      %s129 = sphi 0, %s115
      %s133 = sphi 0, %s133
      %s135 = sphi 0, %s133
      %s136 = sphi 0, %s135
      %s150 = sphi 0, %s136
      %s154 = sphi 0, %s154
      %s156 = sphi 0, %s154
      %s157 = sphi 0, %s156
      %s171 = sphi 0, %s157
      %s175 = sphi 0, %s175
      %s177 = sphi 0, %s175
      %s178 = sphi 0, %s177
      %s192 = sphi 0, %s178
      %s196 = sphi 0, %s196
      %s198 = sphi 0, %s196
      %s199 = sphi 0, %s198
      %s213 = sphi 0, %s199
      %s217 = sphi 0, %s217
      %s219 = sphi 0, %s217
      %s220 = sphi 0, %s219
      %s234 = sphi 0, %s220
      %s240 = sphi 0, %s242
      %s243 = sphi 0, %s240
      %s244 = sphi 0, %s243
      %s260 = sphi 0, %s244
    $region4: #{tpu_custom_call.1} parent=1 // loop_header_branch
      %29 = sbr.rel (%p27) target = $region8
    $region5: #{tpu_custom_call.1} parent=1 // loop_body
      %s31 = ssub.s32 %s26, 1
      %s32 = ssub.s32 %s26, 2
      %s33 = sadd.s32 %s26, 1
      %s34 = ssub.s32 %s26, %s33
      %p35 = scmp.eq.s32.totalorder %s34, 0
      %s37 = sadd.s32 %s36, 1
      %s38 = scalar_select %p35, %s36, %s37
      %p41 = pneg %p35
      %p42 = scmp.eq.s32.totalorder %s26, 1
      %p43 = por %p41, %p42
      %p44 = scmp.ne.s32.totalorder %s36, %s39
      %p45 = scmp.eq.s32.totalorder %s26, 0
      %p46 = por %p44, %p45
      %p47 = scmp.ne.s32.totalorder %s36, %s39
      %p48 = scmp.eq.s32.totalorder %s31, 1
      %p49 = por %p47, %p48
      %p50 = scmp.ne.s32.totalorder %s39, %s40
      %p51 = scmp.eq.s32.totalorder %s31, 0
      %p52 = por %p50, %p51
      %p53 = scmp.ne.s32.totalorder %s39, %s40
      %p54 = scmp.eq.s32.totalorder %s32, 1
      %p55 = por %p53, %p54
      %p57 = scmp.ne.s32.totalorder %s40, %s56
      %p58 = scmp.eq.s32.totalorder %s32, 0
      %p59 = por %p57, %p58
      %s60 = ssub.s32 %s26, %s33
      %p61 = scmp.eq.s32.totalorder %s60, 0
      %s63 = sadd.s32 %s62, 1
      %s64 = scalar_select %p61, %s62, %s63
      %p67 = pneg %p61
      %p68 = scmp.eq.s32.totalorder %s26, 1
      %p69 = por %p67, %p68
      %p70 = scmp.ne.s32.totalorder %s62, %s65
      %p71 = scmp.eq.s32.totalorder %s26, 0
      %p72 = por %p70, %p71
      %p73 = scmp.ne.s32.totalorder %s62, %s65
      %p74 = scmp.eq.s32.totalorder %s31, 1
      %p75 = por %p73, %p74
      %p76 = scmp.ne.s32.totalorder %s65, %s66
      %p77 = scmp.eq.s32.totalorder %s31, 0
      %p78 = por %p76, %p77
      %p79 = scmp.ne.s32.totalorder %s65, %s66
      %p80 = scmp.eq.s32.totalorder %s32, 1
      %p81 = por %p79, %p80
      %p83 = scmp.ne.s32.totalorder %s66, %s82
      %p84 = scmp.eq.s32.totalorder %s32, 0
      %p85 = por %p83, %p84
      %s86 = ssub.s32 %s26, %s33
      %p87 = scmp.eq.s32.totalorder %s86, 0
      %s89 = sadd.s32 %s88, 1
      %s90 = scalar_select %p87, %s88, %s89
      %p93 = pneg %p87
      %p94 = scmp.eq.s32.totalorder %s26, 1
      %p95 = por %p93, %p94
      %p96 = scmp.ne.s32.totalorder %s88, %s91
      %p97 = scmp.eq.s32.totalorder %s26, 0
      %p98 = por %p96, %p97
      %p99 = scmp.ne.s32.totalorder %s88, %s91
      %p100 = scmp.eq.s32.totalorder %s31, 1
      %p101 = por %p99, %p100
      %p102 = scmp.ne.s32.totalorder %s91, %s92
      %p103 = scmp.eq.s32.totalorder %s31, 0
      %p104 = por %p102, %p103
      %p105 = scmp.ne.s32.totalorder %s91, %s92
      %p106 = scmp.eq.s32.totalorder %s32, 1
      %p107 = por %p105, %p106
      %p109 = scmp.ne.s32.totalorder %s92, %s108
      %p110 = scmp.eq.s32.totalorder %s32, 0
      %p111 = por %p109, %p110
      %s113 = sadd.s32 %s112, 1
      %p116 = scmp.eq.s32.totalorder %s26, 1
      %p117 = scmp.ne.s32.totalorder %s112, %s114
      %p118 = scmp.eq.s32.totalorder %s26, 0
      %p119 = por %p117, %p118
      %p120 = scmp.ne.s32.totalorder %s112, %s114
      %p121 = scmp.eq.s32.totalorder %s31, 1
      %p122 = por %p120, %p121
      %p123 = scmp.ne.s32.totalorder %s114, %s115
      %p124 = scmp.eq.s32.totalorder %s31, 0
      %p125 = por %p123, %p124
      %p126 = scmp.ne.s32.totalorder %s114, %s115
      %p127 = scmp.eq.s32.totalorder %s32, 1
      %p128 = por %p126, %p127
      %p130 = scmp.ne.s32.totalorder %s115, %s129
      %p131 = scmp.eq.s32.totalorder %s32, 0
      %p132 = por %p130, %p131
      %s134 = sadd.s32 %s133, 1
      %p137 = scmp.eq.s32.totalorder %s26, 1
      %p138 = scmp.ne.s32.totalorder %s133, %s135
      %p139 = scmp.eq.s32.totalorder %s26, 0
      %p140 = por %p138, %p139
      %p141 = scmp.ne.s32.totalorder %s133, %s135
      %p142 = scmp.eq.s32.totalorder %s31, 1
      %p143 = por %p141, %p142
      %p144 = scmp.ne.s32.totalorder %s135, %s136
      %p145 = scmp.eq.s32.totalorder %s31, 0
      %p146 = por %p144, %p145
      %p147 = scmp.ne.s32.totalorder %s135, %s136
      %p148 = scmp.eq.s32.totalorder %s32, 1
      %p149 = por %p147, %p148
      %p151 = scmp.ne.s32.totalorder %s136, %s150
      %p152 = scmp.eq.s32.totalorder %s32, 0
      %p153 = por %p151, %p152
      %s155 = sadd.s32 %s154, 1
      %p158 = scmp.eq.s32.totalorder %s26, 1
      %p159 = scmp.ne.s32.totalorder %s154, %s156
      %p160 = scmp.eq.s32.totalorder %s26, 0
      %p161 = por %p159, %p160
      %p162 = scmp.ne.s32.totalorder %s154, %s156
      %p163 = scmp.eq.s32.totalorder %s31, 1
      %p164 = por %p162, %p163
      %p165 = scmp.ne.s32.totalorder %s156, %s157
      %p166 = scmp.eq.s32.totalorder %s31, 0
      %p167 = por %p165, %p166
      %p168 = scmp.ne.s32.totalorder %s156, %s157
      %p169 = scmp.eq.s32.totalorder %s32, 1
      %p170 = por %p168, %p169
      %p172 = scmp.ne.s32.totalorder %s157, %s171
      %p173 = scmp.eq.s32.totalorder %s32, 0
      %p174 = por %p172, %p173
      %s176 = sadd.s32 %s175, 1
      %p179 = scmp.eq.s32.totalorder %s26, 1
      %p180 = scmp.ne.s32.totalorder %s175, %s177
      %p181 = scmp.eq.s32.totalorder %s26, 0
      %p182 = por %p180, %p181
      %p183 = scmp.ne.s32.totalorder %s175, %s177
      %p184 = scmp.eq.s32.totalorder %s31, 1
      %p185 = por %p183, %p184
      %p186 = scmp.ne.s32.totalorder %s177, %s178
      %p187 = scmp.eq.s32.totalorder %s31, 0
      %p188 = por %p186, %p187
      %p189 = scmp.ne.s32.totalorder %s177, %s178
      %p190 = scmp.eq.s32.totalorder %s32, 1
      %p191 = por %p189, %p190
      %p193 = scmp.ne.s32.totalorder %s178, %s192
      %p194 = scmp.eq.s32.totalorder %s32, 0
      %p195 = por %p193, %p194
      %s197 = sadd.s32 %s196, 1
      %p200 = scmp.eq.s32.totalorder %s26, 1
      %p201 = scmp.ne.s32.totalorder %s196, %s198
      %p202 = scmp.eq.s32.totalorder %s26, 0
      %p203 = por %p201, %p202
      %p204 = scmp.ne.s32.totalorder %s196, %s198
      %p205 = scmp.eq.s32.totalorder %s31, 1
      %p206 = por %p204, %p205
      %p207 = scmp.ne.s32.totalorder %s198, %s199
      %p208 = scmp.eq.s32.totalorder %s31, 0
      %p209 = por %p207, %p208
      %p210 = scmp.ne.s32.totalorder %s198, %s199
      %p211 = scmp.eq.s32.totalorder %s32, 1
      %p212 = por %p210, %p211
      %p214 = scmp.ne.s32.totalorder %s199, %s213
      %p215 = scmp.eq.s32.totalorder %s32, 0
      %p216 = por %p214, %p215
      %s218 = sadd.s32 %s217, 1
      %p221 = scmp.eq.s32.totalorder %s26, 1
      %p222 = scmp.ne.s32.totalorder %s217, %s219
      %p223 = scmp.eq.s32.totalorder %s26, 0
      %p224 = por %p222, %p223
      %p225 = scmp.ne.s32.totalorder %s217, %s219
      %p226 = scmp.eq.s32.totalorder %s31, 1
      %p227 = por %p225, %p226
      %p228 = scmp.ne.s32.totalorder %s219, %s220
      %p229 = scmp.eq.s32.totalorder %s31, 0
      %p230 = por %p228, %p229
      %p231 = scmp.ne.s32.totalorder %s219, %s220
      %p232 = scmp.eq.s32.totalorder %s32, 1
      %p233 = por %p231, %p232
      %p235 = scmp.ne.s32.totalorder %s220, %s234
      %p236 = scmp.eq.s32.totalorder %s32, 0
      %p237 = por %p235, %p236
      %s238 = ssub.s32 %s26, %s33
      %p239 = scmp.eq.s32.totalorder %s238, 0
      %s241 = sadd.s32 %s240, 1
      %s242 = scalar_select %p239, %s240, %s241
      %p245 = pneg %p239
      %p246 = scmp.eq.s32.totalorder %s26, 1
      %p247 = por %p245, %p246
      %p248 = scmp.ne.s32.totalorder %s240, %s243
      %p249 = scmp.eq.s32.totalorder %s26, 0
      %p250 = por %p248, %p249
      %p251 = scmp.ne.s32.totalorder %s240, %s243
      %p252 = scmp.eq.s32.totalorder %s31, 1
      %p253 = por %p251, %p252
      %p254 = scmp.ne.s32.totalorder %s243, %s244
      %p255 = scmp.eq.s32.totalorder %s31, 0
      %p256 = por %p254, %p255
      %p257 = scmp.ne.s32.totalorder %s243, %s244
      %p258 = scmp.eq.s32.totalorder %s32, 1
      %p259 = por %p257, %p258
      %p261 = scmp.ne.s32.totalorder %s244, %s260
      %p262 = scmp.eq.s32.totalorder %s32, 0
      %p263 = por %p261, %p262
      %p264 = scmp.le.s32.totalorder 1, %s26
      %p265 = scmp.lt.s32.totalorder %s26, 3
      %p266 = pnand %p264, %p265
      %p267 = pneg %p266
      // Predicated region
      $region9: #{tpu_custom_call.1} parent=5 // pred_check
        _
      $region10: #{tpu_custom_call.1} parent=5 // pred_check_branch
        %269 = sbr.rel (%p266) target = $region12
      $region11: #{tpu_custom_call.1} parent=5 // pred_region
        %s270 = ssub.s32 %s26, 1
        // Predicated region
        $region13: #{tpu_custom_call.1} parent=11 // pred_check
          %p271 = pneg %p125
        $region14: #{tpu_custom_call.1} parent=11 // pred_check_branch
          %273 = sbr.rel (%p271) target = $region16
        $region15: #{tpu_custom_call.1} parent=11 // pred_region
          %s275 = ssub.s32 256, 256
          %276 = vsyncadd [#allocation9], %s275
          %s277 = sshll.u32 [#allocation8], 4
          %s278 = int_to_ptr.vmem [resolvable:$true] %s277
          %283 = dma.hbm_to_vmem [thread:$0]  %s3, 256, %s278, [#allocation9], 64, 64, 4
        $region16: #{tpu_custom_call.1} parent=11 // pred_fallthru
          _
        // Predicated region
        $region17: #{tpu_custom_call.1} parent=11 // pred_check
          %p284 = pneg %p146
        $region18: #{tpu_custom_call.1} parent=11 // pred_check_branch
          %286 = sbr.rel (%p284) target = $region20
        $region19: #{tpu_custom_call.1} parent=11 // pred_region
          _
        $region20: #{tpu_custom_call.1} parent=11 // pred_fallthru
          _
        // Predicated region
        $region21: #{tpu_custom_call.1} parent=11 // pred_check
          %p287 = pneg %p167
        $region22: #{tpu_custom_call.1} parent=11 // pred_check_branch
          %289 = sbr.rel (%p287) target = $region24
        $region23: #{tpu_custom_call.1} parent=11 // pred_region
          %s291 = ssub.s32 1024, 1024
          %292 = vsyncadd [#allocation9], %s291
          %s293 = sshll.u32 [#allocation10], 4
          %s294 = int_to_ptr.vmem [resolvable:$true] %s293
          %299 = dma.hbm_to_vmem [thread:$0]  %s5, 1024, %s294, [#allocation9], 64, 64, 4
        $region24: #{tpu_custom_call.1} parent=11 // pred_fallthru
          _
        // Predicated region
        $region25: #{tpu_custom_call.1} parent=11 // pred_check
          %p300 = pneg %p188
        $region26: #{tpu_custom_call.1} parent=11 // pred_check_branch
          %302 = sbr.rel (%p300) target = $region28
        $region27: #{tpu_custom_call.1} parent=11 // pred_region
          _
        $region28: #{tpu_custom_call.1} parent=11 // pred_fallthru
          _
        // Predicated region
        $region29: #{tpu_custom_call.1} parent=11 // pred_check
          %p303 = pneg %p209
        $region30: #{tpu_custom_call.1} parent=11 // pred_check_branch
          %305 = sbr.rel (%p303) target = $region32
        $region31: #{tpu_custom_call.1} parent=11 // pred_region
          %s307 = ssub.s32 1024, 1024
          %308 = vsyncadd [#allocation12], %s307
          %s309 = sshll.u32 [#allocation11], 4
          %s310 = int_to_ptr.vmem [resolvable:$true] %s309
          %315 = dma.hbm_to_vmem [thread:$0]  %s7, 1024, %s310, [#allocation12], 64, 64, 4
        $region32: #{tpu_custom_call.1} parent=11 // pred_fallthru
          _
        // Predicated region
        $region33: #{tpu_custom_call.1} parent=11 // pred_check
          %p316 = pneg %p230
        $region34: #{tpu_custom_call.1} parent=11 // pred_check_branch
          %318 = sbr.rel (%p316) target = $region36
        $region35: #{tpu_custom_call.1} parent=11 // pred_region
          _
        $region36: #{tpu_custom_call.1} parent=11 // pred_fallthru
          _
      $region12: #{tpu_custom_call.1} parent=5 // pred_fallthru
        _
      %p319 = scmp.lt.s32.totalorder %s26, 2
      // Predicated region
      $region37: #{tpu_custom_call.1} parent=5 // pred_check
        %p320 = pneg %p319
      $region38: #{tpu_custom_call.1} parent=5 // pred_check_branch
        %322 = sbr.rel (%p320) target = $region40
      $region39: #{tpu_custom_call.1} parent=5 // pred_region
        // Predicated region
        $region41: #{tpu_custom_call.1} parent=39 // pred_check
          %p323 = pneg %p46
        $region42: #{tpu_custom_call.1} parent=39 // pred_check_branch
          %325 = sbr.rel (%p323) target = $region44
        $region43: #{tpu_custom_call.1} parent=39 // pred_region
          %s326 = sand.u32 %s36, 1
          %s327 = scalar_lea.sflag [#allocation3], %s326
          %s328 = sand.u32 %s36, 1
          %s329 = smul.addr %s328, 8
          %s330 = scalar_lea.vmem [#allocation2], %s329
          %s332 = ssub.s32 128, 128
          %333 = vsyncadd %s327, %s332
          %s334 = smul.addr %s26, 128
          %s335 = scalar_lea.hbm %s0, %s334
          %s337 = sshll.u32 %s330, 4
          %s338 = int_to_ptr.vmem [resolvable:$true] %s337
          %340 = dma.hbm_to_vmem [thread:$0]  %s335, 128, %s338, %s327
        $region44: #{tpu_custom_call.1} parent=39 // pred_fallthru
          _
        // Predicated region
        $region45: #{tpu_custom_call.1} parent=39 // pred_check
          %p341 = pneg %p72
        $region46: #{tpu_custom_call.1} parent=39 // pred_check_branch
          %343 = sbr.rel (%p341) target = $region48
        $region47: #{tpu_custom_call.1} parent=39 // pred_region
          %s344 = sand.u32 %s26, 1
          %s345 = scalar_lea.sflag [#allocation6], %s344
          %s346 = sand.u32 %s62, 1
          %s347 = smul.addr %s346, 8
          %s348 = scalar_lea.vmem [#allocation5], %s347
          %s350 = ssub.s32 128, 128
          %351 = vsyncadd %s345, %s350
          %s352 = smul.addr %s26, 128
          %s353 = scalar_lea.hbm %s1, %s352
          %s355 = sshll.u32 %s348, 4
          %s356 = int_to_ptr.vmem [resolvable:$true] %s355
          %358 = dma.hbm_to_vmem [thread:$0]  %s353, 128, %s356, %s345
        $region48: #{tpu_custom_call.1} parent=39 // pred_fallthru
          _
        // Predicated region
        $region49: #{tpu_custom_call.1} parent=39 // pred_check
          %p359 = pneg %p98
        $region50: #{tpu_custom_call.1} parent=39 // pred_check_branch
          %361 = sbr.rel (%p359) target = $region52
        $region51: #{tpu_custom_call.1} parent=39 // pred_region
          %s362 = sand.u32 %s26, 1
          %s363 = scalar_lea.sflag [#allocation6], %s362
          %s364 = sand.u32 %s88, 1
          %s365 = smul.addr %s364, 8
          %s366 = scalar_lea.vmem [#allocation7], %s365
          %s368 = ssub.s32 128, 128
          %369 = vsyncadd %s363, %s368
          %s370 = smul.addr %s26, 128
          %s371 = scalar_lea.hbm %s2, %s370
          %s373 = sshll.u32 %s366, 4
          %s374 = int_to_ptr.vmem [resolvable:$true] %s373
          %376 = dma.hbm_to_vmem [thread:$0]  %s371, 128, %s374, %s363
        $region52: #{tpu_custom_call.1} parent=39 // pred_fallthru
          _
      $region40: #{tpu_custom_call.1} parent=5 // pred_fallthru
        _
      %p377 = scmp.le.s32.totalorder 1, %s26
      %p378 = scmp.lt.s32.totalorder %s26, 3
      %p379 = pnand %p377, %p378
      %p380 = pneg %p379
      // Predicated region
      $region53: #{tpu_custom_call.1} parent=5 // pred_check
        _
      $region54: #{tpu_custom_call.1} parent=5 // pred_check_branch
        %382 = sbr.rel (%p379) target = $region56
      $region55: #{tpu_custom_call.1} parent=5 // pred_region
        %s383 = ssub.s32 %s26, 1
        %s384 = sand.u32 %s39, 1
        %s385 = scalar_lea.sflag [#allocation3], %s384
        %s386 = sand.u32 %s39, 1
        %s387 = smul.addr %s386, 8
        %s388 = scalar_lea.vmem [#allocation2], %s387
        // Predicated region
        $region57: #{tpu_custom_call.1} parent=55 // pred_check
          %p389 = pneg %p52
        $region58: #{tpu_custom_call.1} parent=55 // pred_check_branch
          %391 = sbr.rel (%p389) target = $region60
        $region59: #{tpu_custom_call.1} parent=55 // pred_region
          %392 = dma.done %s385, 128
        $region60: #{tpu_custom_call.1} parent=55 // pred_fallthru
          _
        %s393 = sand.u32 %s31, 1
        %s394 = scalar_lea.sflag [#allocation6], %s393
        %s395 = sand.u32 %s65, 1
        %s396 = smul.addr %s395, 8
        %s397 = scalar_lea.vmem [#allocation5], %s396
        // Predicated region
        $region61: #{tpu_custom_call.1} parent=55 // pred_check
          %p398 = pneg %p78
        $region62: #{tpu_custom_call.1} parent=55 // pred_check_branch
          %400 = sbr.rel (%p398) target = $region64
        $region63: #{tpu_custom_call.1} parent=55 // pred_region
          %401 = dma.done %s394, 128
        $region64: #{tpu_custom_call.1} parent=55 // pred_fallthru
          _
        %s402 = sand.u32 %s31, 1
        %s403 = scalar_lea.sflag [#allocation6], %s402
        %s404 = sand.u32 %s91, 1
        %s405 = smul.addr %s404, 8
        %s406 = scalar_lea.vmem [#allocation7], %s405
        // Predicated region
        $region65: #{tpu_custom_call.1} parent=55 // pred_check
          %p407 = pneg %p104
        $region66: #{tpu_custom_call.1} parent=55 // pred_check_branch
          %409 = sbr.rel (%p407) target = $region68
        $region67: #{tpu_custom_call.1} parent=55 // pred_region
          %410 = dma.done %s403, 128
        $region68: #{tpu_custom_call.1} parent=55 // pred_fallthru
          _
        // Predicated region
        $region69: #{tpu_custom_call.1} parent=55 // pred_check
          %p411 = pneg %p125
        $region70: #{tpu_custom_call.1} parent=55 // pred_check_branch
          %413 = sbr.rel (%p411) target = $region72
        $region71: #{tpu_custom_call.1} parent=55 // pred_region
          %414 = dma.done [#allocation9], 256
        $region72: #{tpu_custom_call.1} parent=55 // pred_fallthru
          _
        // Predicated region
        $region73: #{tpu_custom_call.1} parent=55 // pred_check
          %p415 = pneg %p167
        $region74: #{tpu_custom_call.1} parent=55 // pred_check_branch
          %417 = sbr.rel (%p415) target = $region76
        $region75: #{tpu_custom_call.1} parent=55 // pred_region
          %418 = dma.done [#allocation9], 1024
        $region76: #{tpu_custom_call.1} parent=55 // pred_fallthru
          _
        // Predicated region
        $region77: #{tpu_custom_call.1} parent=55 // pred_check
          %p419 = pneg %p209
        $region78: #{tpu_custom_call.1} parent=55 // pred_check_branch
          %421 = sbr.rel (%p419) target = $region80
        $region79: #{tpu_custom_call.1} parent=55 // pred_region
          %422 = dma.done [#allocation12], 1024
        $region80: #{tpu_custom_call.1} parent=55 // pred_fallthru
          _
        %s423 = sand.u32 %s39, 1
        %s424 = scalar_lea.sflag [#allocation3], %s423
        %s425 = sand.u32 %s39, 1
        %s426 = smul.addr %s425, 8
        %s427 = scalar_lea.vmem [#allocation2], %s426
        %p428 = pneg %p52
        %p429 = pneg %p49
        %s430 = sand.u32 %s31, 1
        %s431 = scalar_lea.sflag [#allocation6], %s430
        %s432 = sand.u32 %s65, 1
        %s433 = smul.addr %s432, 8
        %s434 = scalar_lea.vmem [#allocation5], %s433
        %p435 = pneg %p78
        %p436 = pneg %p75
        %s437 = sand.u32 %s31, 1
        %s438 = scalar_lea.sflag [#allocation6], %s437
        %s439 = sand.u32 %s91, 1
        %s440 = smul.addr %s439, 8
        %s441 = scalar_lea.vmem [#allocation7], %s440
        %p442 = pneg %p104
        %p443 = pneg %p101
        %p444 = pneg %p125
        %p445 = pneg %p122
        %p446 = pneg %p146
        %p447 = pneg %p143
        %p448 = pneg %p167
        %p449 = pneg %p164
        %p450 = pneg %p188
        %p451 = pneg %p185
        %p452 = pneg %p209
        %p453 = pneg %p206
        %p454 = pneg %p230
        %p455 = pneg %p227
        %p456 = pneg %p256
        %p457 = pneg %p253
        %s458 = sand.u32 %s243, 1
        %s459 = scalar_lea.sflag [#allocation4], %s458
        %s460 = sand.u32 %s243, 1
        %s461 = smul.addr %s460, 8
        %s462 = scalar_lea.vmem [#allocation13], %s461
        %v464 = vld [vmem:[%s388] sm:$0xff]
        %v465 = vld [vmem:[%s397] sm:$0xff]
        %v466 = vadd.f32 %v464, %v465
        %v467 = vld [vmem:[%s406] sm:$0xff]
        %v468 = vadd.f32 %v466, %v467
        %v469 = vmul.f32 %v468, 0.33333334
        %v470 = vpack.c.bf16 %v469, %v469
        %v471 = vld [vmem:[#allocation8] sm:$0xf]
        %v472 = vld [vmem:[#allocation8 + $0x4] sm:$0xf]
        %v473 = vld [vmem:[#allocation8 + $0x8] sm:$0xf]
        %v474 = vld [vmem:[#allocation8 + $0xc] sm:$0xf]
        %v475 = vld [vmem:[%s4] sm:$0x1]
        %v477 = vlaneseq
        %v478 = vshrl.u32 %v477, 7
        %v479 = vsub.s32 0, %v478
        %v480 = vrot.slane %v475, %v479
        %v486 = vunpack.c.l.b16 %v471
        %v487 = vunpack.c.l.b16 %v472
        %v488 = vunpack.c.l.b16 %v473
        %v489 = vunpack.c.l.b16 %v474
        %v490 = vpack.c.b16 %v487, %v486
        %v491 = vpack.c.b16 %v489, %v488
        %vm494 = vcmask 261120
        %v496 = vsel %vm494, %v470, 0
        %498 = vmatprep.subr.bf16.mxu0 0
        %499 = vmatpush1.bf16.msra.mxu0 0
        %500 = vmatprep.subr.bf16.mxu0 0
        %501 = vmatpush1.bf16.msra.mxu0 0
        %502 = vmatprep.subr.bf16.mxu0 0
        %503 = vmatpush1.bf16.msra.mxu0 0
        %504 = vmatprep.subr.bf16.mxu0 0
        %505 = vmatpush1.bf16.msra.mxu0 0
        %506 = vmatprep.subr.bf16.mxu0 0
        %507 = vmatpush1.bf16.msra.mxu0 0
        %508 = vmatprep.subr.bf16.mxu0 0
        %509 = vmatpush1.bf16.msra.mxu0 0
        %510 = vmatprep.subr.bf16.mxu0 0
        %511 = vmatpush1.bf16.msra.mxu0 %v491
        %512 = vmatprep.subr.bf16.mxu0 0
        %513 = vmatpush1.bf16.msra.mxu0 %v490
        %514 = vmatprep.subr.bf16.mxu0 0
        %515 = vmatpush2.bf16.msra.mxu0 0
        %516 = vmatprep.subr.bf16.mxu0 0
        %517 = vmatpush2.bf16.msra.mxu0 0
        %518 = vmatprep.subr.bf16.mxu0 0
        %519 = vmatpush2.bf16.msra.mxu0 0
        %520 = vmatprep.subr.bf16.mxu0 0
        %521 = vmatpush2.bf16.msra.mxu0 0
        %522 = vmatprep.subr.bf16.mxu0 0
        %523 = vmatpush2.bf16.msra.mxu0 0
        %524 = vmatprep.subr.bf16.mxu0 0
        %525 = vmatpush2.bf16.msra.mxu0 0
        %526 = vmatprep.subr.bf16.mxu0 0
        %527 = vmatpush2.bf16.msra.mxu0 0
        %528 = vmatprep.subr.bf16.mxu0 0
        %529 = vmatpush2.bf16.msra.mxu0 0
        %530 = vmatprep.mubr.bf16.mxu0 0
        %531 = vmatmul.mubr.bf16.gmra.mxu0 %v496
        %v532 = vpop.f32.mrf.mxu0
        %v533 = vadd.f32 %v480, %v532
        %v534 = vpop.f32.mrf.mxu0
        %v535 = vpop.f32.mrf.mxu0
        %v536 = vpop.f32.mrf.mxu0
        %537 = vdwg.mxu0
        %v538 = vmax.f32 %v533, 0.0
        %v539 = vpack.c.bf16 %v538, %v538
        %v540 = vld [vmem:[#allocation10] sm:$0xf]
        %v541 = vld [vmem:[#allocation10 + $0x4] sm:$0xf]
        %v542 = vld [vmem:[#allocation10 + $0x8] sm:$0xf]
        %v543 = vld [vmem:[#allocation10 + $0xc] sm:$0xf]
        %v544 = vld [vmem:[#allocation10 + $0x10] sm:$0xf]
        %v545 = vld [vmem:[#allocation10 + $0x14] sm:$0xf]
        %v546 = vld [vmem:[#allocation10 + $0x18] sm:$0xf]
        %v547 = vld [vmem:[#allocation10 + $0x1c] sm:$0xf]
        %v548 = vld [vmem:[#allocation10 + $0x20] sm:$0xf]
        %v549 = vld [vmem:[#allocation10 + $0x24] sm:$0xf]
        %v550 = vld [vmem:[#allocation10 + $0x28] sm:$0xf]
        %v551 = vld [vmem:[#allocation10 + $0x2c] sm:$0xf]
        %v552 = vld [vmem:[#allocation10 + $0x30] sm:$0xf]
        %v553 = vld [vmem:[#allocation10 + $0x34] sm:$0xf]
        %v554 = vld [vmem:[#allocation10 + $0x38] sm:$0xf]
        %v555 = vld [vmem:[#allocation10 + $0x3c] sm:$0xf]
        %v556 = vld [vmem:[%s6] sm:$0x1]
        %v558 = vlaneseq
        %v559 = vshrl.u32 %v558, 7
        %v560 = vsub.s32 0, %v559
        %v561 = vrot.slane %v556, %v560
        %v579 = vunpack.c.l.b16 %v540
        %v580 = vunpack.c.l.b16 %v541
        %v581 = vunpack.c.l.b16 %v542
        %v582 = vunpack.c.l.b16 %v543
        %v583 = vunpack.c.l.b16 %v544
        %v584 = vunpack.c.l.b16 %v545
        %v585 = vunpack.c.l.b16 %v546
        %v586 = vunpack.c.l.b16 %v547
        %v587 = vunpack.c.l.b16 %v548
        %v588 = vunpack.c.l.b16 %v549
        %v589 = vunpack.c.l.b16 %v550
        %v590 = vunpack.c.l.b16 %v551
        %v591 = vunpack.c.l.b16 %v552
        %v592 = vunpack.c.l.b16 %v553
        %v593 = vunpack.c.l.b16 %v554
        %v594 = vunpack.c.l.b16 %v555
        %v595 = vpack.c.b16 %v580, %v579
        %v596 = vpack.c.b16 %v582, %v581
        %v597 = vpack.c.b16 %v584, %v583
        %v598 = vpack.c.b16 %v586, %v585
        %v599 = vpack.c.b16 %v588, %v587
        %v600 = vpack.c.b16 %v590, %v589
        %v601 = vpack.c.b16 %v592, %v591
        %v602 = vpack.c.b16 %v594, %v593
        %611 = vmatprep.subr.bf16.mxu0 0
        %612 = vmatpush1.bf16.msra.mxu0 %v602
        %613 = vmatprep.subr.bf16.mxu0 0
        %614 = vmatpush1.bf16.msra.mxu0 %v601
        %615 = vmatprep.subr.bf16.mxu0 0
        %616 = vmatpush1.bf16.msra.mxu0 %v600
        %617 = vmatprep.subr.bf16.mxu0 0
        %618 = vmatpush1.bf16.msra.mxu0 %v599
        %619 = vmatprep.subr.bf16.mxu0 0
        %620 = vmatpush1.bf16.msra.mxu0 %v598
        %621 = vmatprep.subr.bf16.mxu0 0
        %622 = vmatpush1.bf16.msra.mxu0 %v597
        %623 = vmatprep.subr.bf16.mxu0 0
        %624 = vmatpush1.bf16.msra.mxu0 %v596
        %625 = vmatprep.subr.bf16.mxu0 0
        %626 = vmatpush1.bf16.msra.mxu0 %v595
        %627 = vmatprep.subr.bf16.mxu0 0
        %628 = vmatpush2.bf16.msra.mxu0 0
        %629 = vmatprep.subr.bf16.mxu0 0
        %630 = vmatpush2.bf16.msra.mxu0 0
        %631 = vmatprep.subr.bf16.mxu0 0
        %632 = vmatpush2.bf16.msra.mxu0 0
        %633 = vmatprep.subr.bf16.mxu0 0
        %634 = vmatpush2.bf16.msra.mxu0 0
        %635 = vmatprep.subr.bf16.mxu0 0
        %636 = vmatpush2.bf16.msra.mxu0 0
        %637 = vmatprep.subr.bf16.mxu0 0
        %638 = vmatpush2.bf16.msra.mxu0 0
        %639 = vmatprep.subr.bf16.mxu0 0
        %640 = vmatpush2.bf16.msra.mxu0 0
        %641 = vmatprep.subr.bf16.mxu0 0
        %642 = vmatpush2.bf16.msra.mxu0 0
        %643 = vmatprep.mubr.bf16.mxu0 0
        %644 = vmatmul.mubr.bf16.gmra.mxu0 %v539
        %v645 = vpop.f32.mrf.mxu0
        %v646 = vadd.f32 %v561, %v645
        %v647 = vpop.f32.mrf.mxu0
        %v648 = vpop.f32.mrf.mxu0
        %v649 = vpop.f32.mrf.mxu0
        %650 = vdwg.mxu0
        %v651 = vmax.f32 %v646, 0.0
        %v652 = vpack.c.bf16 %v651, %v651
        %v653 = vld [vmem:[#allocation11] sm:$0xf]
        %v654 = vld [vmem:[#allocation11 + $0x4] sm:$0xf]
        %v655 = vld [vmem:[#allocation11 + $0x8] sm:$0xf]
        %v656 = vld [vmem:[#allocation11 + $0xc] sm:$0xf]
        %v657 = vld [vmem:[#allocation11 + $0x10] sm:$0xf]
        %v658 = vld [vmem:[#allocation11 + $0x14] sm:$0xf]
        %v659 = vld [vmem:[#allocation11 + $0x18] sm:$0xf]
        %v660 = vld [vmem:[#allocation11 + $0x1c] sm:$0xf]
        %v661 = vld [vmem:[#allocation11 + $0x20] sm:$0xf]
        %v662 = vld [vmem:[#allocation11 + $0x24] sm:$0xf]
        %v663 = vld [vmem:[#allocation11 + $0x28] sm:$0xf]
        %v664 = vld [vmem:[#allocation11 + $0x2c] sm:$0xf]
        %v665 = vld [vmem:[#allocation11 + $0x30] sm:$0xf]
        %v666 = vld [vmem:[#allocation11 + $0x34] sm:$0xf]
        %v667 = vld [vmem:[#allocation11 + $0x38] sm:$0xf]
        %v668 = vld [vmem:[#allocation11 + $0x3c] sm:$0xf]
        %v669 = vld [vmem:[%s8] sm:$0x1]
        %v671 = vlaneseq
        %v672 = vshrl.u32 %v671, 7
        %v673 = vsub.s32 0, %v672
        %v674 = vrot.slane %v669, %v673
        %v692 = vunpack.c.l.b16 %v653
        %v693 = vunpack.c.l.b16 %v654
        %v694 = vunpack.c.l.b16 %v655
        %v695 = vunpack.c.l.b16 %v656
        %v696 = vunpack.c.l.b16 %v657
        %v697 = vunpack.c.l.b16 %v658
        %v698 = vunpack.c.l.b16 %v659
        %v699 = vunpack.c.l.b16 %v660
        %v700 = vunpack.c.l.b16 %v661
        %v701 = vunpack.c.l.b16 %v662
        %v702 = vunpack.c.l.b16 %v663
        %v703 = vunpack.c.l.b16 %v664
        %v704 = vunpack.c.l.b16 %v665
        %v705 = vunpack.c.l.b16 %v666
        %v706 = vunpack.c.l.b16 %v667
        %v707 = vunpack.c.l.b16 %v668
        %v708 = vpack.c.b16 %v693, %v692
        %v709 = vpack.c.b16 %v695, %v694
        %v710 = vpack.c.b16 %v697, %v696
        %v711 = vpack.c.b16 %v699, %v698
        %v712 = vpack.c.b16 %v701, %v700
        %v713 = vpack.c.b16 %v703, %v702
        %v714 = vpack.c.b16 %v705, %v704
        %v715 = vpack.c.b16 %v707, %v706
        %724 = vmatprep.subr.bf16.mxu0 0
        %725 = vmatpush1.bf16.msra.mxu0 %v715
        %726 = vmatprep.subr.bf16.mxu0 0
        %727 = vmatpush1.bf16.msra.mxu0 %v714
        %728 = vmatprep.subr.bf16.mxu0 0
        %729 = vmatpush1.bf16.msra.mxu0 %v713
        %730 = vmatprep.subr.bf16.mxu0 0
        %731 = vmatpush1.bf16.msra.mxu0 %v712
        %732 = vmatprep.subr.bf16.mxu0 0
        %733 = vmatpush1.bf16.msra.mxu0 %v711
        %734 = vmatprep.subr.bf16.mxu0 0
        %735 = vmatpush1.bf16.msra.mxu0 %v710
        %736 = vmatprep.subr.bf16.mxu0 0
        %737 = vmatpush1.bf16.msra.mxu0 %v709
        %738 = vmatprep.subr.bf16.mxu0 0
        %739 = vmatpush1.bf16.msra.mxu0 %v708
        %740 = vmatprep.subr.bf16.mxu0 0
        %741 = vmatpush2.bf16.msra.mxu0 0
        %742 = vmatprep.subr.bf16.mxu0 0
        %743 = vmatpush2.bf16.msra.mxu0 0
        %744 = vmatprep.subr.bf16.mxu0 0
        %745 = vmatpush2.bf16.msra.mxu0 0
        %746 = vmatprep.subr.bf16.mxu0 0
        %747 = vmatpush2.bf16.msra.mxu0 0
        %748 = vmatprep.subr.bf16.mxu0 0
        %749 = vmatpush2.bf16.msra.mxu0 0
        %750 = vmatprep.subr.bf16.mxu0 0
        %751 = vmatpush2.bf16.msra.mxu0 0
        %752 = vmatprep.subr.bf16.mxu0 0
        %753 = vmatpush2.bf16.msra.mxu0 0
        %754 = vmatprep.subr.bf16.mxu0 0
        %755 = vmatpush2.bf16.msra.mxu0 0
        %756 = vmatprep.mubr.bf16.mxu0 0
        %757 = vmatmul.mubr.bf16.gmra.mxu0 %v652
        %v758 = vpop.f32.mrf.mxu0
        %v759 = vadd.f32 %v674, %v758
        %v760 = vpop.f32.mrf.mxu0
        %v761 = vpop.f32.mrf.mxu0
        %v762 = vpop.f32.mrf.mxu0
        %763 = vdwg.mxu0
        %764 = vst [vmem:[%s462] sm:$0xff] %v759
        %s765 = sand.u32 %s243, 1
        %s766 = scalar_lea.sflag [#allocation4], %s765
        %s767 = sand.u32 %s243, 1
        %s768 = smul.addr %s767, 8
        %s769 = scalar_lea.vmem [#allocation13], %s768
        // Predicated region
        $region81: #{tpu_custom_call.1} parent=55 // pred_check
          %p770 = pneg %p253
        $region82: #{tpu_custom_call.1} parent=55 // pred_check_branch
          %772 = sbr.rel (%p770) target = $region84
        $region83: #{tpu_custom_call.1} parent=55 // pred_region
          %s774 = ssub.s32 128, 128
          %775 = vsyncadd %s766, %s774
          %s776 = smul.addr %s31, 128
          %s777 = scalar_lea.hbm %s9, %s776
          %s779 = sshll.u32 %s769, 4
          %s780 = int_to_ptr.vmem [resolvable:$true] %s779
          %782 = dma.vmem_to_hbm [thread:$0]  %s780, 128, %s777, %s766
        $region84: #{tpu_custom_call.1} parent=55 // pred_fallthru
          _
      $region56: #{tpu_custom_call.1} parent=5 // pred_fallthru
        _
      %p783 = scmp.le.s32.totalorder 2, %s26
      // Predicated region
      $region85: #{tpu_custom_call.1} parent=5 // pred_check
        %p784 = pneg %p783
      $region86: #{tpu_custom_call.1} parent=5 // pred_check_branch
        %786 = sbr.rel (%p784) target = $region88
      $region87: #{tpu_custom_call.1} parent=5 // pred_region
        %s787 = ssub.s32 %s26, 2
        // Predicated region
        $region89: #{tpu_custom_call.1} parent=87 // pred_check
          %p788 = pneg %p259
        $region90: #{tpu_custom_call.1} parent=87 // pred_check_branch
          %790 = sbr.rel (%p788) target = $region92
        $region91: #{tpu_custom_call.1} parent=87 // pred_region
          %s791 = sand.u32 %s244, 1
          %s792 = scalar_lea.sflag [#allocation4], %s791
          %s793 = sand.u32 %s244, 1
          %s794 = smul.addr %s793, 8
          %s795 = scalar_lea.vmem [#allocation13], %s794
          %796 = dma.done %s792, 128
        $region92: #{tpu_custom_call.1} parent=87 // pred_fallthru
          _
      $region88: #{tpu_custom_call.1} parent=5 // pred_fallthru
        _
    $region6: #{tpu_custom_call.1} parent=1 // loop_footer
      %s30 = sadd.s32 1, %s26
    $region7: #{tpu_custom_call.1} parent=1 // loop_footer_branch
      %25 = sbr.rel target = $region3
    $region8: #{tpu_custom_call.1} parent=1 // loop_exit
      _
    %797 = vsyncpa [#allocation3], 1
    %s798 = scalar_lea.sflag [#allocation3], 1
    %799 = vsyncpa %s798, 1
    %800 = vsyncpa [#allocation6], 1
    %s801 = scalar_lea.sflag [#allocation6], 1
    %802 = vsyncpa %s801, 1
    %803 = vsyncpa [#allocation9], 1
    %804 = vsyncpa [#allocation12], 1
    %805 = vsyncpa [#allocation4], 1
    %s806 = scalar_lea.sflag [#allocation4], 1
    %807 = vsyncpa %s806, 1

// kernel: tpu_custom_call.1
$region0: #{tpu_custom_call.1}
  #allocation0 [shape = 'u32[]', space=smem, size = 0x4, offset = 0x4, fixed_abs, tag = 'smem constant byte address 0x4 - core index']
  #allocation1 [shape = 'u32[144,128]{1,0:T(1,128)}', space=vmem, size = 0x12000, scoped, tag = 'internal scratch']
  %s0 = inlined_call_operand.hbm [shape: f32[16,32], index: 0, kind: input, shape index: {}]
  %s1 = inlined_call_operand.hbm [shape: f32[16,32], index: 1, kind: input, shape index: {}]
  %s2 = inlined_call_operand.hbm [shape: f32[16,32], index: 2, kind: input, shape index: {}]
  %s3 = inlined_call_operand.hbm [shape: bf16[32,128], index: 3, kind: input, shape index: {}]
  %s4 = inlined_call_operand.vmem [shape: f32[1,128], index: 4, kind: input, shape index: {}]
  %s5 = inlined_call_operand.hbm [shape: bf16[128,128], index: 5, kind: input, shape index: {}]
  %s6 = inlined_call_operand.vmem [shape: f32[1,128], index: 6, kind: input, shape index: {}]
  %s7 = inlined_call_operand.hbm [shape: bf16[128,128], index: 7, kind: input, shape index: {}]
  %s8 = inlined_call_operand.vmem [shape: f32[1,128], index: 8, kind: input, shape index: {}]
  %s9 = inlined_call_operand.hbm [shape: f32[16,128], index: 9, kind: output, shape index: {}]
  %s10 = sld [smem:[#allocation0]]
  $region93: #{tpu_custom_call.1} parent=0
    _
  %s12 = ssub.s32 1, %s10
  %s13 = scalar_select 0, %s12, %s10
  $region1: #{tpu_custom_call.1} parent=0
    #allocation2 [shape = 'u8[8192]{0}', space=vmem, size = 0x2000, scoped, tag = 'input window, operand 0']
    #allocation3 [shape = 's32[2]{0}', space=sflag, size = 0x8, scoped, tag = 'scoped memory for tpu_custom_call.1']
    #allocation4 [shape = 's32[2]{0}', space=sflag, size = 0x8, scoped, tag = 'scoped memory for tpu_custom_call.1']
    #allocation5 [shape = 'u8[8192]{0}', space=vmem, size = 0x2000, scoped, tag = 'input window, operand 1']
    #allocation6 [shape = 's32[2]{0}', space=sflag, size = 0x8, scoped, tag = 'scoped memory for tpu_custom_call.1']
    #allocation7 [shape = 'u8[8192]{0}', space=vmem, size = 0x2000, scoped, tag = 'input window, operand 2']
    #allocation8 [shape = 'u8[8192]{0}', space=vmem, size = 0x2000, scoped, tag = 'input window, operand 3, single buffered']
    #allocation9 [shape = 's32[1]{0}', space=sflag, size = 0x4, scoped, tag = 'scoped memory for tpu_custom_call.1']
    #allocation10 [shape = 'u8[32768]{0}', space=vmem, size = 0x8000, scoped, tag = 'input window, operand 5, single buffered']
    #allocation11 [shape = 'u8[32768]{0}', space=vmem, size = 0x8000, scoped, tag = 'input window, operand 7, single buffered']
    #allocation12 [shape = 's32[1]{0}', space=sflag, size = 0x4, scoped, tag = 'scoped memory for tpu_custom_call.1']
    #allocation13 [shape = 'u8[8192]{0}', space=vmem, size = 0x2000, scoped, tag = 'output window, operand 0']
    %14 = vsyncpa [#allocation3], 0
    %s15 = scalar_lea.sflag [#allocation3], 1
    %16 = vsyncpa %s15, 0
    %17 = vsyncpa [#allocation6], 0
    %s18 = scalar_lea.sflag [#allocation6], 1
    %19 = vsyncpa %s18, 0
    %20 = vsyncpa [#allocation9], 0
    %21 = vsyncpa [#allocation12], 0
    %22 = vsyncpa [#allocation4], 0
    %s23 = scalar_lea.sflag [#allocation4], 1
    %24 = vsyncpa %s23, 0
    loop: start=0, step=1, limit=4
    $region2: #{tpu_custom_call.1} parent=1 // loop_pre_header
      _
    $region3: #{tpu_custom_call.1} parent=1 // loop_header
      %s26 = sphi 0, %s30
      %p27 = scmp.ge.s32.totalorder %s26, 4
      %s36 = sphi 0, %s38
      %s39 = sphi 0, %s36
      %s40 = sphi 0, %s39
      %s56 = sphi 0, %s40
      %s62 = sphi 0, %s64
      %s65 = sphi 0, %s62
      %s66 = sphi 0, %s65
      %s82 = sphi 0, %s66
      %s88 = sphi 0, %s90
      %s91 = sphi 0, %s88
      %s92 = sphi 0, %s91
      %s108 = sphi 0, %s92
      %s112 = sphi 0, %s112
      %s114 = sphi 0, %s112
      %s115 = sphi 0, %s114
      %s129 = sphi 0, %s115
      %s133 = sphi 0, %s133
      %s135 = sphi 0, %s133
      %s136 = sphi 0, %s135
      %s150 = sphi 0, %s136
      %s154 = sphi 0, %s154
      %s156 = sphi 0, %s154
      %s157 = sphi 0, %s156
      %s171 = sphi 0, %s157
      %s175 = sphi 0, %s175
      %s177 = sphi 0, %s175
      %s178 = sphi 0, %s177
      %s192 = sphi 0, %s178
      %s196 = sphi 0, %s196
      %s198 = sphi 0, %s196
      %s199 = sphi 0, %s198
      %s213 = sphi 0, %s199
      %s217 = sphi 0, %s217
      %s219 = sphi 0, %s217
      %s220 = sphi 0, %s219
      %s234 = sphi 0, %s220
      %s240 = sphi 0, %s242
      %s243 = sphi 0, %s240
      %s244 = sphi 0, %s243
      %s260 = sphi 0, %s244
    $region4: #{tpu_custom_call.1} parent=1 // loop_header_branch
      %29 = sbr.rel (%p27) target = $region8
    $region5: #{tpu_custom_call.1} parent=1 // loop_body
      %s31 = ssub.s32 %s26, 1
      %s32 = ssub.s32 %s26, 2
      %s33 = sadd.s32 %s26, 1
      %s34 = ssub.s32 %s26, %s33
      %p35 = scmp.eq.s32.totalorder %s34, 0
      %s37 = sadd.s32 %s36, 1
      %s38 = scalar_select %p35, %s36, %s37
      %p41 = pneg %p35
      %p42 = scmp.eq.s32.totalorder %s26, 1
      %p43 = por %p41, %p42
      %p44 = scmp.ne.s32.totalorder %s36, %s39
      %p45 = scmp.eq.s32.totalorder %s26, 0
      %p46 = por %p44, %p45
      %p47 = scmp.ne.s32.totalorder %s36, %s39
      %p48 = scmp.eq.s32.totalorder %s31, 1
      %p49 = por %p47, %p48
      %p50 = scmp.ne.s32.totalorder %s39, %s40
      %p51 = scmp.eq.s32.totalorder %s31, 0
      %p52 = por %p50, %p51
      %p53 = scmp.ne.s32.totalorder %s39, %s40
      %p54 = scmp.eq.s32.totalorder %s32, 1
      %p55 = por %p53, %p54
      %p57 = scmp.ne.s32.totalorder %s40, %s56
      %p58 = scmp.eq.s32.totalorder %s32, 0
      %p59 = por %p57, %p58
      %s60 = ssub.s32 %s26, %s33
      %p61 = scmp.eq.s32.totalorder %s60, 0
      %s63 = sadd.s32 %s62, 1
      %s64 = scalar_select %p61, %s62, %s63
      %p67 = pneg %p61
      %p68 = scmp.eq.s32.totalorder %s26, 1
      %p69 = por %p67, %p68
      %p70 = scmp.ne.s32.totalorder %s62, %s65
      %p71 = scmp.eq.s32.totalorder %s26, 0
      %p72 = por %p70, %p71
      %p73 = scmp.ne.s32.totalorder %s62, %s65
      %p74 = scmp.eq.s32.totalorder %s31, 1
      %p75 = por %p73, %p74
      %p76 = scmp.ne.s32.totalorder %s65, %s66
      %p77 = scmp.eq.s32.totalorder %s31, 0
      %p78 = por %p76, %p77
      %p79 = scmp.ne.s32.totalorder %s65, %s66
      %p80 = scmp.eq.s32.totalorder %s32, 1
      %p81 = por %p79, %p80
      %p83 = scmp.ne.s32.totalorder %s66, %s82
      %p84 = scmp.eq.s32.totalorder %s32, 0
      %p85 = por %p83, %p84
      %s86 = ssub.s32 %s26, %s33
      %p87 = scmp.eq.s32.totalorder %s86, 0
      %s89 = sadd.s32 %s88, 1
      %s90 = scalar_select %p87, %s88, %s89
      %p93 = pneg %p87
      %p94 = scmp.eq.s32.totalorder %s26, 1
      %p95 = por %p93, %p94
      %p96 = scmp.ne.s32.totalorder %s88, %s91
      %p97 = scmp.eq.s32.totalorder %s26, 0
      %p98 = por %p96, %p97
      %p99 = scmp.ne.s32.totalorder %s88, %s91
      %p100 = scmp.eq.s32.totalorder %s31, 1
      %p101 = por %p99, %p100
      %p102 = scmp.ne.s32.totalorder %s91, %s92
      %p103 = scmp.eq.s32.totalorder %s31, 0
      %p104 = por %p102, %p103
      %p105 = scmp.ne.s32.totalorder %s91, %s92
      %p106 = scmp.eq.s32.totalorder %s32, 1
      %p107 = por %p105, %p106
      %p109 = scmp.ne.s32.totalorder %s92, %s108
      %p110 = scmp.eq.s32.totalorder %s32, 0
      %p111 = por %p109, %p110
      %s113 = sadd.s32 %s112, 1
      %p116 = scmp.eq.s32.totalorder %s26, 1
      %p117 = scmp.ne.s32.totalorder %s112, %s114
      %p118 = scmp.eq.s32.totalorder %s26, 0
      %p119 = por %p117, %p118
      %p120 = scmp.ne.s32.totalorder %s112, %s114
      %p121 = scmp.eq.s32.totalorder %s31, 1
      %p122 = por %p120, %p121
      %p123 = scmp.ne.s32.totalorder %s114, %s115
      %p124 = scmp.eq.s32.totalorder %s31, 0
      %p125 = por %p123, %p124
      %p126 = scmp.ne.s32.totalorder %s114, %s115
      %p127 = scmp.eq.s32.totalorder %s32, 1
      %p128 = por %p126, %p127
      %p130 = scmp.ne.s32.totalorder %s115, %s129
      %p131 = scmp.eq.s32.totalorder %s32, 0
      %p132 = por %p130, %p131
      %s134 = sadd.s32 %s133, 1
      %p137 = scmp.eq.s32.totalorder %s26, 1
      %p138 = scmp.ne.s32.totalorder %s133, %s135
      %p139 = scmp.eq.s32.totalorder %s26, 0
      %p140 = por %p138, %p139
      %p141 = scmp.ne.s32.totalorder %s133, %s135
      %p142 = scmp.eq.s32.totalorder %s31, 1
      %p143 = por %p141, %p142
      %p144 = scmp.ne.s32.totalorder %s135, %s136
      %p145 = scmp.eq.s32.totalorder %s31, 0
      %p146 = por %p144, %p145
      %p147 = scmp.ne.s32.totalorder %s135, %s136
      %p148 = scmp.eq.s32.totalorder %s32, 1
      %p149 = por %p147, %p148
      %p151 = scmp.ne.s32.totalorder %s136, %s150
      %p152 = scmp.eq.s32.totalorder %s32, 0
      %p153 = por %p151, %p152
      %s155 = sadd.s32 %s154, 1
      %p158 = scmp.eq.s32.totalorder %s26, 1
      %p159 = scmp.ne.s32.totalorder %s154, %s156
      %p160 = scmp.eq.s32.totalorder %s26, 0
      %p161 = por %p159, %p160
      %p162 = scmp.ne.s32.totalorder %s154, %s156
      %p163 = scmp.eq.s32.totalorder %s31, 1
      %p164 = por %p162, %p163
      %p165 = scmp.ne.s32.totalorder %s156, %s157
      %p166 = scmp.eq.s32.totalorder %s31, 0
      %p167 = por %p165, %p166
      %p168 = scmp.ne.s32.totalorder %s156, %s157
      %p169 = scmp.eq.s32.totalorder %s32, 1
      %p170 = por %p168, %p169
      %p172 = scmp.ne.s32.totalorder %s157, %s171
      %p173 = scmp.eq.s32.totalorder %s32, 0
      %p174 = por %p172, %p173
      %s176 = sadd.s32 %s175, 1
      %p179 = scmp.eq.s32.totalorder %s26, 1
      %p180 = scmp.ne.s32.totalorder %s175, %s177
      %p181 = scmp.eq.s32.totalorder %s26, 0
      %p182 = por %p180, %p181
      %p183 = scmp.ne.s32.totalorder %s175, %s177
      %p184 = scmp.eq.s32.totalorder %s31, 1
      %p185 = por %p183, %p184
      %p186 = scmp.ne.s32.totalorder %s177, %s178
      %p187 = scmp.eq.s32.totalorder %s31, 0
      %p188 = por %p186, %p187
      %p189 = scmp.ne.s32.totalorder %s177, %s178
      %p190 = scmp.eq.s32.totalorder %s32, 1
      %p191 = por %p189, %p190
      %p193 = scmp.ne.s32.totalorder %s178, %s192
      %p194 = scmp.eq.s32.totalorder %s32, 0
      %p195 = por %p193, %p194
      %s197 = sadd.s32 %s196, 1
      %p200 = scmp.eq.s32.totalorder %s26, 1
      %p201 = scmp.ne.s32.totalorder %s196, %s198
      %p202 = scmp.eq.s32.totalorder %s26, 0
      %p203 = por %p201, %p202
      %p204 = scmp.ne.s32.totalorder %s196, %s198
      %p205 = scmp.eq.s32.totalorder %s31, 1
      %p206 = por %p204, %p205
      %p207 = scmp.ne.s32.totalorder %s198, %s199
      %p208 = scmp.eq.s32.totalorder %s31, 0
      %p209 = por %p207, %p208
      %p210 = scmp.ne.s32.totalorder %s198, %s199
      %p211 = scmp.eq.s32.totalorder %s32, 1
      %p212 = por %p210, %p211
      %p214 = scmp.ne.s32.totalorder %s199, %s213
      %p215 = scmp.eq.s32.totalorder %s32, 0
      %p216 = por %p214, %p215
      %s218 = sadd.s32 %s217, 1
      %p221 = scmp.eq.s32.totalorder %s26, 1
      %p222 = scmp.ne.s32.totalorder %s217, %s219
      %p223 = scmp.eq.s32.totalorder %s26, 0
      %p224 = por %p222, %p223
      %p225 = scmp.ne.s32.totalorder %s217, %s219
      %p226 = scmp.eq.s32.totalorder %s31, 1
      %p227 = por %p225, %p226
      %p228 = scmp.ne.s32.totalorder %s219, %s220
      %p229 = scmp.eq.s32.totalorder %s31, 0
      %p230 = por %p228, %p229
      %p231 = scmp.ne.s32.totalorder %s219, %s220
      %p232 = scmp.eq.s32.totalorder %s32, 1
      %p233 = por %p231, %p232
      %p235 = scmp.ne.s32.totalorder %s220, %s234
      %p236 = scmp.eq.s32.totalorder %s32, 0
      %p237 = por %p235, %p236
      %s238 = ssub.s32 %s26, %s33
      %p239 = scmp.eq.s32.totalorder %s238, 0
      %s241 = sadd.s32 %s240, 1
      %s242 = scalar_select %p239, %s240, %s241
      %p245 = pneg %p239
      %p246 = scmp.eq.s32.totalorder %s26, 1
      %p247 = por %p245, %p246
      %p248 = scmp.ne.s32.totalorder %s240, %s243
      %p249 = scmp.eq.s32.totalorder %s26, 0
      %p250 = por %p248, %p249
      %p251 = scmp.ne.s32.totalorder %s240, %s243
      %p252 = scmp.eq.s32.totalorder %s31, 1
      %p253 = por %p251, %p252
      %p254 = scmp.ne.s32.totalorder %s243, %s244
      %p255 = scmp.eq.s32.totalorder %s31, 0
      %p256 = por %p254, %p255
      %p257 = scmp.ne.s32.totalorder %s243, %s244
      %p258 = scmp.eq.s32.totalorder %s32, 1
      %p259 = por %p257, %p258
      %p261 = scmp.ne.s32.totalorder %s244, %s260
      %p262 = scmp.eq.s32.totalorder %s32, 0
      %p263 = por %p261, %p262
      %p264 = scmp.le.s32.totalorder 1, %s26
      %p265 = scmp.lt.s32.totalorder %s26, 3
      %p266 = pnand %p264, %p265
      %p267 = pneg %p266
      // Predicated region
      $region9: #{tpu_custom_call.1} parent=5 // pred_check
        _
      $region10: #{tpu_custom_call.1} parent=5 // pred_check_branch
        %269 = sbr.rel (%p266) target = $region12
      $region11: #{tpu_custom_call.1} parent=5 // pred_region
        %s270 = ssub.s32 %s26, 1
        // Predicated region
        $region13: #{tpu_custom_call.1} parent=11 // pred_check
          %p271 = pneg %p125
        $region14: #{tpu_custom_call.1} parent=11 // pred_check_branch
          %273 = sbr.rel (%p271) target = $region16
        $region15: #{tpu_custom_call.1} parent=11 // pred_region
          %s275 = ssub.s32 256, 256
          %276 = vsyncadd [#allocation9], %s275
          %s277 = sshll.u32 [#allocation8], 4
          %s278 = int_to_ptr.vmem [resolvable:$true] %s277
          %283 = dma.hbm_to_vmem [thread:$0]  %s3, 256, %s278, [#allocation9], 64, 64, 4
        $region16: #{tpu_custom_call.1} parent=11 // pred_fallthru
          _
        // Predicated region
        $region17: #{tpu_custom_call.1} parent=11 // pred_check
          %p284 = pneg %p146
        $region18: #{tpu_custom_call.1} parent=11 // pred_check_branch
          %286 = sbr.rel (%p284) target = $region20
        $region19: #{tpu_custom_call.1} parent=11 // pred_region
          _
        $region20: #{tpu_custom_call.1} parent=11 // pred_fallthru
          _
        // Predicated region
        $region21: #{tpu_custom_call.1} parent=11 // pred_check
          %p287 = pneg %p167
        $region22: #{tpu_custom_call.1} parent=11 // pred_check_branch
          %289 = sbr.rel (%p287) target = $region24
        $region23: #{tpu_custom_call.1} parent=11 // pred_region
          %s291 = ssub.s32 1024, 1024
          %292 = vsyncadd [#allocation9], %s291
          %s293 = sshll.u32 [#allocation10], 4
          %s294 = int_to_ptr.vmem [resolvable:$true] %s293
          %299 = dma.hbm_to_vmem [thread:$0]  %s5, 1024, %s294, [#allocation9], 64, 64, 4
        $region24: #{tpu_custom_call.1} parent=11 // pred_fallthru
          _
        // Predicated region
        $region25: #{tpu_custom_call.1} parent=11 // pred_check
          %p300 = pneg %p188
        $region26: #{tpu_custom_call.1} parent=11 // pred_check_branch
          %302 = sbr.rel (%p300) target = $region28
        $region27: #{tpu_custom_call.1} parent=11 // pred_region
          _
        $region28: #{tpu_custom_call.1} parent=11 // pred_fallthru
          _
        // Predicated region
        $region29: #{tpu_custom_call.1} parent=11 // pred_check
          %p303 = pneg %p209
        $region30: #{tpu_custom_call.1} parent=11 // pred_check_branch
          %305 = sbr.rel (%p303) target = $region32
        $region31: #{tpu_custom_call.1} parent=11 // pred_region
          %s307 = ssub.s32 1024, 1024
          %308 = vsyncadd [#allocation12], %s307
          %s309 = sshll.u32 [#allocation11], 4
          %s310 = int_to_ptr.vmem [resolvable:$true] %s309
          %315 = dma.hbm_to_vmem [thread:$0]  %s7, 1024, %s310, [#allocation12], 64, 64, 4
        $region32: #{tpu_custom_call.1} parent=11 // pred_fallthru
          _
        // Predicated region
        $region33: #{tpu_custom_call.1} parent=11 // pred_check
          %p316 = pneg %p230
        $region34: #{tpu_custom_call.1} parent=11 // pred_check_branch
          %318 = sbr.rel (%p316) target = $region36
        $region35: #{tpu_custom_call.1} parent=11 // pred_region
          _
        $region36: #{tpu_custom_call.1} parent=11 // pred_fallthru
          _
      $region12: #{tpu_custom_call.1} parent=5 // pred_fallthru
        _
      %p319 = scmp.lt.s32.totalorder %s26, 2
      // Predicated region
      $region37: #{tpu_custom_call.1} parent=5 // pred_check
        %p320 = pneg %p319
      $region38: #{tpu_custom_call.1} parent=5 // pred_check_branch
        %322 = sbr.rel (%p320) target = $region40
      $region39: #{tpu_custom_call.1} parent=5 // pred_region
        // Predicated region
        $region41: #{tpu_custom_call.1} parent=39 // pred_check
          %p323 = pneg %p46
        $region42: #{tpu_custom_call.1} parent=39 // pred_check_branch
          %325 = sbr.rel (%p323) target = $region44
        $region43: #{tpu_custom_call.1} parent=39 // pred_region
          %s326 = sand.u32 %s36, 1
          %s327 = scalar_lea.sflag [#allocation3], %s326
          %s328 = sand.u32 %s36, 1
          %s329 = smul.addr %s328, 8
          %s330 = scalar_lea.vmem [#allocation2], %s329
          %s332 = ssub.s32 128, 128
          %333 = vsyncadd %s327, %s332
          %s334 = smul.addr %s26, 128
          %s335 = scalar_lea.hbm %s0, %s334
          %s337 = sshll.u32 %s330, 4
          %s338 = int_to_ptr.vmem [resolvable:$true] %s337
          %340 = dma.hbm_to_vmem [thread:$0]  %s335, 128, %s338, %s327
        $region44: #{tpu_custom_call.1} parent=39 // pred_fallthru
          _
        // Predicated region
        $region45: #{tpu_custom_call.1} parent=39 // pred_check
          %p341 = pneg %p72
        $region46: #{tpu_custom_call.1} parent=39 // pred_check_branch
          %343 = sbr.rel (%p341) target = $region48
        $region47: #{tpu_custom_call.1} parent=39 // pred_region
          %s344 = sand.u32 %s26, 1
          %s345 = scalar_lea.sflag [#allocation6], %s344
          %s346 = sand.u32 %s62, 1
          %s347 = smul.addr %s346, 8
          %s348 = scalar_lea.vmem [#allocation5], %s347
          %s350 = ssub.s32 128, 128
          %351 = vsyncadd %s345, %s350
          %s352 = smul.addr %s26, 128
          %s353 = scalar_lea.hbm %s1, %s352
          %s355 = sshll.u32 %s348, 4
          %s356 = int_to_ptr.vmem [resolvable:$true] %s355
          %358 = dma.hbm_to_vmem [thread:$0]  %s353, 128, %s356, %s345
        $region48: #{tpu_custom_call.1} parent=39 // pred_fallthru
          _
        // Predicated region
        $region49: #{tpu_custom_call.1} parent=39 // pred_check
          %p359 = pneg %p98
        $region50: #{tpu_custom_call.1} parent=39 // pred_check_branch
          %361 = sbr.rel (%p359) target = $region52
        $region51: #{tpu_custom_call.1} parent=39 // pred_region
          %s362 = sand.u32 %s26, 1
          %s363 = scalar_lea.sflag [#allocation6], %s362
          %s364 = sand.u32 %s88, 1
          %s365 = smul.addr %s364, 8
          %s366 = scalar_lea.vmem [#allocation7], %s365
          %s368 = ssub.s32 128, 128
          %369 = vsyncadd %s363, %s368
          %s370 = smul.addr %s26, 128
          %s371 = scalar_lea.hbm %s2, %s370
          %s373 = sshll.u32 %s366, 4
          %s374 = int_to_ptr.vmem [resolvable:$true] %s373
          %376 = dma.hbm_to_vmem [thread:$0]  %s371, 128, %s374, %s363
        $region52: #{tpu_custom_call.1} parent=39 // pred_fallthru
          _
      $region40: #{tpu_custom_call.1} parent=5 // pred_fallthru
        _
      %p377 = scmp.le.s32.totalorder 1, %s26
      %p378 = scmp.lt.s32.totalorder %s26, 3
      %p379 = pnand %p377, %p378
      %p380 = pneg %p379
      // Predicated region
      $region53: #{tpu_custom_call.1} parent=5 // pred_check
        _
      $region54: #{tpu_custom_call.1} parent=5 // pred_check_branch
        %382 = sbr.rel (%p379) target = $region56
      $region55: #{tpu_custom_call.1} parent=5 // pred_region
        %s383 = ssub.s32 %s26, 1
        %s384 = sand.u32 %s39, 1
        %s385 = scalar_lea.sflag [#allocation3], %s384
        %s386 = sand.u32 %s39, 1
        %s387 = smul.addr %s386, 8
        %s388 = scalar_lea.vmem [#allocation2], %s387
        // Predicated region
        $region57: #{tpu_custom_call.1} parent=55 // pred_check
          %p389 = pneg %p52
        $region58: #{tpu_custom_call.1} parent=55 // pred_check_branch
          %391 = sbr.rel (%p389) target = $region60
        $region59: #{tpu_custom_call.1} parent=55 // pred_region
          %392 = dma.done %s385, 128
        $region60: #{tpu_custom_call.1} parent=55 // pred_fallthru
          _
        %s393 = sand.u32 %s31, 1
        %s394 = scalar_lea.sflag [#allocation6], %s393
        %s395 = sand.u32 %s65, 1
        %s396 = smul.addr %s395, 8
        %s397 = scalar_lea.vmem [#allocation5], %s396
        // Predicated region
        $region61: #{tpu_custom_call.1} parent=55 // pred_check
          %p398 = pneg %p78
        $region62: #{tpu_custom_call.1} parent=55 // pred_check_branch
          %400 = sbr.rel (%p398) target = $region64
        $region63: #{tpu_custom_call.1} parent=55 // pred_region
          %401 = dma.done %s394, 128
        $region64: #{tpu_custom_call.1} parent=55 // pred_fallthru
          _
        %s402 = sand.u32 %s31, 1
        %s403 = scalar_lea.sflag [#allocation6], %s402
        %s404 = sand.u32 %s91, 1
        %s405 = smul.addr %s404, 8
        %s406 = scalar_lea.vmem [#allocation7], %s405
        // Predicated region
        $region65: #{tpu_custom_call.1} parent=55 // pred_check
          %p407 = pneg %p104
        $region66: #{tpu_custom_call.1} parent=55 // pred_check_branch
          %409 = sbr.rel (%p407) target = $region68
        $region67: #{tpu_custom_call.1} parent=55 // pred_region
          %410 = dma.done %s403, 128
        $region68: #{tpu_custom_call.1} parent=55 // pred_fallthru
          _
        // Predicated region
        $region69: #{tpu_custom_call.1} parent=55 // pred_check
          %p411 = pneg %p125
        $region70: #{tpu_custom_call.1} parent=55 // pred_check_branch
          %413 = sbr.rel (%p411) target = $region72
        $region71: #{tpu_custom_call.1} parent=55 // pred_region
          %414 = dma.done [#allocation9], 256
        $region72: #{tpu_custom_call.1} parent=55 // pred_fallthru
          _
        // Predicated region
        $region73: #{tpu_custom_call.1} parent=55 // pred_check
          %p415 = pneg %p167
        $region74: #{tpu_custom_call.1} parent=55 // pred_check_branch
          %417 = sbr.rel (%p415) target = $region76
        $region75: #{tpu_custom_call.1} parent=55 // pred_region
          %418 = dma.done [#allocation9], 1024
        $region76: #{tpu_custom_call.1} parent=55 // pred_fallthru
          _
        // Predicated region
        $region77: #{tpu_custom_call.1} parent=55 // pred_check
          %p419 = pneg %p209
        $region78: #{tpu_custom_call.1} parent=55 // pred_check_branch
          %421 = sbr.rel (%p419) target = $region80
        $region79: #{tpu_custom_call.1} parent=55 // pred_region
          %422 = dma.done [#allocation12], 1024
        $region80: #{tpu_custom_call.1} parent=55 // pred_fallthru
          _
        %s423 = sand.u32 %s39, 1
        %s424 = scalar_lea.sflag [#allocation3], %s423
        %s425 = sand.u32 %s39, 1
        %s426 = smul.addr %s425, 8
        %s427 = scalar_lea.vmem [#allocation2], %s426
        %p428 = pneg %p52
        %p429 = pneg %p49
        %s430 = sand.u32 %s31, 1
        %s431 = scalar_lea.sflag [#allocation6], %s430
        %s432 = sand.u32 %s65, 1
        %s433 = smul.addr %s432, 8
        %s434 = scalar_lea.vmem [#allocation5], %s433
        %p435 = pneg %p78
        %p436 = pneg %p75
        %s437 = sand.u32 %s31, 1
        %s438 = scalar_lea.sflag [#allocation6], %s437
        %s439 = sand.u32 %s91, 1
        %s440 = smul.addr %s439, 8
        %s441 = scalar_lea.vmem [#allocation7], %s440
        %p442 = pneg %p104
        %p443 = pneg %p101
        %p444 = pneg %p125
        %p445 = pneg %p122
        %p446 = pneg %p146
        %p447 = pneg %p143
        %p448 = pneg %p167
        %p449 = pneg %p164
        %p450 = pneg %p188
        %p451 = pneg %p185
        %p452 = pneg %p209
        %p453 = pneg %p206
        %p454 = pneg %p230
        %p455 = pneg %p227
        %p456 = pneg %p256
        %p457 = pneg %p253
        %s458 = sand.u32 %s243, 1
        %s459 = scalar_lea.sflag [#allocation4], %s458
        %s460 = sand.u32 %s243, 1
        %s461 = smul.addr %s460, 8
        %s462 = scalar_lea.vmem [#allocation13], %s461
        %v464 = vld [vmem:[%s388] sm:$0xff]
        %v465 = vld [vmem:[%s397] sm:$0xff]
        %v466 = vadd.f32 %v464, %v465
        %v467 = vld [vmem:[%s406] sm:$0xff]
        %v468 = vadd.f32 %v466, %v467
        %v469 = vmul.f32 %v468, 0.33333334
        %v470 = vpack.c.bf16 %v469, %v469
        %v471 = vld [vmem:[#allocation8] sm:$0xf]
        %v472 = vld [vmem:[#allocation8 + $0x4] sm:$0xf]
        %v473 = vld [vmem:[#allocation8 + $0x8] sm:$0xf]
        %v474 = vld [vmem:[#allocation8 + $0xc] sm:$0xf]
        %v475 = vld [vmem:[%s4] sm:$0x1]
        %v477 = vlaneseq
        %v478 = vshrl.u32 %v477, 7
        %v479 = vsub.s32 0, %v478
        %v480 = vrot.slane %v475, %v479
        %v486 = vunpack.c.l.b16 %v471
        %v487 = vunpack.c.l.b16 %v472
        %v488 = vunpack.c.l.b16 %v473
        %v489 = vunpack.c.l.b16 %v474
        %v490 = vpack.c.b16 %v487, %v486
        %v491 = vpack.c.b16 %v489, %v488
        %vm494 = vcmask 261120
        %v496 = vsel %vm494, %v470, 0
        %498 = vmatprep.subr.bf16.mxu0 0
        %499 = vmatpush1.bf16.msra.mxu0 0
        %500 = vmatprep.subr.bf16.mxu0 0
        %501 = vmatpush1.bf16.msra.mxu0 0
        %502 = vmatprep.subr.bf16.mxu0 0
        %503 = vmatpush1.bf16.msra.mxu0 0
        %504 = vmatprep.subr.bf16.mxu0 0
        %505 = vmatpush1.bf16.msra.mxu0 0
        %506 = vmatprep.subr.bf16.mxu0 0
        %507 = vmatpush1.bf16.msra.mxu0 0
        %508 = vmatprep.subr.bf16.mxu0 0
        %509 = vmatpush1.bf16.msra.mxu0 0
        %510 = vmatprep.subr.bf16.mxu0 0
        %511 = vmatpush1.bf16.msra.mxu0 %v491
        %512 = vmatprep.subr.bf16.mxu0 0
        %513 = vmatpush1.bf16.msra.mxu0 %v490
        %514 = vmatprep.subr.bf16.mxu0 0
        %515 = vmatpush2.bf16.msra.mxu0 0
        %516 = vmatprep.subr.bf16.mxu0 0
        %517 = vmatpush2.bf16.msra.mxu0 0
        %518 = vmatprep.subr.bf16.mxu0 0
        %519 = vmatpush2.bf16.msra.mxu0 0
        %520 = vmatprep.subr.bf16.mxu0 0
        %521 = vmatpush2.bf16.msra.mxu0 0
        %522 = vmatprep.subr.bf16.mxu0 0
        %523 = vmatpush2.bf16.msra.mxu0 0
        %524 = vmatprep.subr.bf16.mxu0 0
        %525 = vmatpush2.bf16.msra.mxu0 0
        %526 = vmatprep.subr.bf16.mxu0 0
        %527 = vmatpush2.bf16.msra.mxu0 0
        %528 = vmatprep.subr.bf16.mxu0 0
        %529 = vmatpush2.bf16.msra.mxu0 0
        %530 = vmatprep.mubr.bf16.mxu0 0
        %531 = vmatmul.mubr.bf16.gmra.mxu0 %v496
        %v532 = vpop.f32.mrf.mxu0
        %v533 = vadd.f32 %v480, %v532
        %v534 = vpop.f32.mrf.mxu0
        %v535 = vpop.f32.mrf.mxu0
        %v536 = vpop.f32.mrf.mxu0
        %537 = vdwg.mxu0
        %v538 = vmax.f32 %v533, 0.0
        %v539 = vpack.c.bf16 %v538, %v538
        %v540 = vld [vmem:[#allocation10] sm:$0xf]
        %v541 = vld [vmem:[#allocation10 + $0x4] sm:$0xf]
        %v542 = vld [vmem:[#allocation10 + $0x8] sm:$0xf]
        %v543 = vld [vmem:[#allocation10 + $0xc] sm:$0xf]
        %v544 = vld [vmem:[#allocation10 + $0x10] sm:$0xf]
        %v545 = vld [vmem:[#allocation10 + $0x14] sm:$0xf]
        %v546 = vld [vmem:[#allocation10 + $0x18] sm:$0xf]
        %v547 = vld [vmem:[#allocation10 + $0x1c] sm:$0xf]
        %v548 = vld [vmem:[#allocation10 + $0x20] sm:$0xf]
        %v549 = vld [vmem:[#allocation10 + $0x24] sm:$0xf]
        %v550 = vld [vmem:[#allocation10 + $0x28] sm:$0xf]
        %v551 = vld [vmem:[#allocation10 + $0x2c] sm:$0xf]
        %v552 = vld [vmem:[#allocation10 + $0x30] sm:$0xf]
        %v553 = vld [vmem:[#allocation10 + $0x34] sm:$0xf]
        %v554 = vld [vmem:[#allocation10 + $0x38] sm:$0xf]
        %v555 = vld [vmem:[#allocation10 + $0x3c] sm:$0xf]
        %v556 = vld [vmem:[%s6] sm:$0x1]
        %v558 = vlaneseq
        %v559 = vshrl.u32 %v558, 7
        %v560 = vsub.s32 0, %v559
        %v561 = vrot.slane %v556, %v560
        %v579 = vunpack.c.l.b16 %v540
        %v580 = vunpack.c.l.b16 %v541
        %v581 = vunpack.c.l.b16 %v542
        %v582 = vunpack.c.l.b16 %v543
        %v583 = vunpack.c.l.b16 %v544
        %v584 = vunpack.c.l.b16 %v545
        %v585 = vunpack.c.l.b16 %v546
        %v586 = vunpack.c.l.b16 %v547
        %v587 = vunpack.c.l.b16 %v548
        %v588 = vunpack.c.l.b16 %v549
        %v589 = vunpack.c.l.b16 %v550
        %v590 = vunpack.c.l.b16 %v551
        %v591 = vunpack.c.l.b16 %v552
        %v592 = vunpack.c.l.b16 %v553
        %v593 = vunpack.c.l.b16 %v554
        %v594 = vunpack.c.l.b16 %v555
        %v595 = vpack.c.b16 %v580, %v579
        %v596 = vpack.c.b16 %v582, %v581
        %v597 = vpack.c.b16 %v584, %v583
        %v598 = vpack.c.b16 %v586, %v585
        %v599 = vpack.c.b16 %v588, %v587
        %v600 = vpack.c.b16 %v590, %v589
        %v601 = vpack.c.b16 %v592, %v591
        %v602 = vpack.c.b16 %v594, %v593
        %611 = vmatprep.subr.bf16.mxu0 0
        %612 = vmatpush1.bf16.msra.mxu0 %v602
        %613 = vmatprep.subr.bf16.mxu0 0
        %614 = vmatpush1.bf16.msra.mxu0 %v601
        %615 = vmatprep.subr.bf16.mxu0 0
        %616 = vmatpush1.bf16.msra.mxu0 %v600
        %617 = vmatprep.subr.bf16.mxu0 0
        %618 = vmatpush1.bf16.msra.mxu0 %v599
        %619 = vmatprep.subr.bf16.mxu0 0
        %620 = vmatpush1.bf16.msra.mxu0 %v598
        %621 = vmatprep.subr.bf16.mxu0 0
        %622 = vmatpush1.bf16.msra.mxu0 %v597
        %623 = vmatprep.subr.bf16.mxu0 0
        %624 = vmatpush1.bf16.msra.mxu0 %v596
        %625 = vmatprep.subr.bf16.mxu0 0
        %626 = vmatpush1.bf16.msra.mxu0 %v595
        %627 = vmatprep.subr.bf16.mxu0 0
        %628 = vmatpush2.bf16.msra.mxu0 0
        %629 = vmatprep.subr.bf16.mxu0 0
        %630 = vmatpush2.bf16.msra.mxu0 0
        %631 = vmatprep.subr.bf16.mxu0 0
        %632 = vmatpush2.bf16.msra.mxu0 0
        %633 = vmatprep.subr.bf16.mxu0 0
        %634 = vmatpush2.bf16.msra.mxu0 0
        %635 = vmatprep.subr.bf16.mxu0 0
        %636 = vmatpush2.bf16.msra.mxu0 0
        %637 = vmatprep.subr.bf16.mxu0 0
        %638 = vmatpush2.bf16.msra.mxu0 0
        %639 = vmatprep.subr.bf16.mxu0 0
        %640 = vmatpush2.bf16.msra.mxu0 0
        %641 = vmatprep.subr.bf16.mxu0 0
        %642 = vmatpush2.bf16.msra.mxu0 0
        %643 = vmatprep.mubr.bf16.mxu0 0
        %644 = vmatmul.mubr.bf16.gmra.mxu0 %v539
        %v645 = vpop.f32.mrf.mxu0
        %v646 = vadd.f32 %v561, %v645
        %v647 = vpop.f32.mrf.mxu0
        %v648 = vpop.f32.mrf.mxu0
        %v649 = vpop.f32.mrf.mxu0
        %650 = vdwg.mxu0
        %v651 = vmax.f32 %v646, 0.0
        %v652 = vpack.c.bf16 %v651, %v651
        %v653 = vld [vmem:[#allocation11] sm:$0xf]
        %v654 = vld [vmem:[#allocation11 + $0x4] sm:$0xf]
        %v655 = vld [vmem:[#allocation11 + $0x8] sm:$0xf]
        %v656 = vld [vmem:[#allocation11 + $0xc] sm:$0xf]
        %v657 = vld [vmem:[#allocation11 + $0x10] sm:$0xf]
        %v658 = vld [vmem:[#allocation11 + $0x14] sm:$0xf]
        %v659 = vld [vmem:[#allocation11 + $0x18] sm:$0xf]
        %v660 = vld [vmem:[#allocation11 + $0x1c] sm:$0xf]
        %v661 = vld [vmem:[#allocation11 + $0x20] sm:$0xf]
        %v662 = vld [vmem:[#allocation11 + $0x24] sm:$0xf]
        %v663 = vld [vmem:[#allocation11 + $0x28] sm:$0xf]
        %v664 = vld [vmem:[#allocation11 + $0x2c] sm:$0xf]
        %v665 = vld [vmem:[#allocation11 + $0x30] sm:$0xf]
        %v666 = vld [vmem:[#allocation11 + $0x34] sm:$0xf]
        %v667 = vld [vmem:[#allocation11 + $0x38] sm:$0xf]
        %v668 = vld [vmem:[#allocation11 + $0x3c] sm:$0xf]
        %v669 = vld [vmem:[%s8] sm:$0x1]
        %v671 = vlaneseq
        %v672 = vshrl.u32 %v671, 7
        %v673 = vsub.s32 0, %v672
        %v674 = vrot.slane %v669, %v673
        %v692 = vunpack.c.l.b16 %v653
        %v693 = vunpack.c.l.b16 %v654
        %v694 = vunpack.c.l.b16 %v655
        %v695 = vunpack.c.l.b16 %v656
        %v696 = vunpack.c.l.b16 %v657
        %v697 = vunpack.c.l.b16 %v658
        %v698 = vunpack.c.l.b16 %v659
        %v699 = vunpack.c.l.b16 %v660
        %v700 = vunpack.c.l.b16 %v661
        %v701 = vunpack.c.l.b16 %v662
        %v702 = vunpack.c.l.b16 %v663
        %v703 = vunpack.c.l.b16 %v664
        %v704 = vunpack.c.l.b16 %v665
        %v705 = vunpack.c.l.b16 %v666
        %v706 = vunpack.c.l.b16 %v667
        %v707 = vunpack.c.l.b16 %v668
        %v708 = vpack.c.b16 %v693, %v692
        %v709 = vpack.c.b16 %v695, %v694
        %v710 = vpack.c.b16 %v697, %v696
        %v711 = vpack.c.b16 %v699, %v698
        %v712 = vpack.c.b16 %v701, %v700
        %v713 = vpack.c.b16 %v703, %v702
        %v714 = vpack.c.b16 %v705, %v704
        %v715 = vpack.c.b16 %v707, %v706
        %724 = vmatprep.subr.bf16.mxu0 0
        %725 = vmatpush1.bf16.msra.mxu0 %v715
        %726 = vmatprep.subr.bf16.mxu0 0
        %727 = vmatpush1.bf16.msra.mxu0 %v714
        %728 = vmatprep.subr.bf16.mxu0 0
        %729 = vmatpush1.bf16.msra.mxu0 %v713
        %730 = vmatprep.subr.bf16.mxu0 0
        %731 = vmatpush1.bf16.msra.mxu0 %v712
        %732 = vmatprep.subr.bf16.mxu0 0
        %733 = vmatpush1.bf16.msra.mxu0 %v711
        %734 = vmatprep.subr.bf16.mxu0 0
        %735 = vmatpush1.bf16.msra.mxu0 %v710
        %736 = vmatprep.subr.bf16.mxu0 0
        %737 = vmatpush1.bf16.msra.mxu0 %v709
        %738 = vmatprep.subr.bf16.mxu0 0
        %739 = vmatpush1.bf16.msra.mxu0 %v708
        %740 = vmatprep.subr.bf16.mxu0 0
        %741 = vmatpush2.bf16.msra.mxu0 0
        %742 = vmatprep.subr.bf16.mxu0 0
        %743 = vmatpush2.bf16.msra.mxu0 0
        %744 = vmatprep.subr.bf16.mxu0 0
        %745 = vmatpush2.bf16.msra.mxu0 0
        %746 = vmatprep.subr.bf16.mxu0 0
        %747 = vmatpush2.bf16.msra.mxu0 0
        %748 = vmatprep.subr.bf16.mxu0 0
        %749 = vmatpush2.bf16.msra.mxu0 0
        %750 = vmatprep.subr.bf16.mxu0 0
        %751 = vmatpush2.bf16.msra.mxu0 0
        %752 = vmatprep.subr.bf16.mxu0 0
        %753 = vmatpush2.bf16.msra.mxu0 0
        %754 = vmatprep.subr.bf16.mxu0 0
        %755 = vmatpush2.bf16.msra.mxu0 0
        %756 = vmatprep.mubr.bf16.mxu0 0
        %757 = vmatmul.mubr.bf16.gmra.mxu0 %v652
        %v758 = vpop.f32.mrf.mxu0
        %v759 = vadd.f32 %v674, %v758
        %v760 = vpop.f32.mrf.mxu0
        %v761 = vpop.f32.mrf.mxu0
        %v762 = vpop.f32.mrf.mxu0
        %763 = vdwg.mxu0
        %764 = vst [vmem:[%s462] sm:$0xff] %v759
        %s765 = sand.u32 %s243, 1
        %s766 = scalar_lea.sflag [#allocation4], %s765
        %s767 = sand.u32 %s243, 1
        %s768 = smul.addr %s767, 8
        %s769 = scalar_lea.vmem [#allocation13], %s768
        // Predicated region
        $region81: #{tpu_custom_call.1} parent=55 // pred_check
          %p770 = pneg %p253
        $region82: #{tpu_custom_call.1} parent=55 // pred_check_branch
          %772 = sbr.rel (%p770) target = $region84
        $region83: #{tpu_custom_call.1} parent=55 // pred_region
          %s774 = ssub.s32 128, 128
          %775 = vsyncadd %s766, %s774
          %s776 = smul.addr %s31, 128
          %s777 = scalar_lea.hbm %s9, %s776
          %s779 = sshll.u32 %s769, 4
          %s780 = int_to_ptr.vmem [resolvable:$true] %s779
          %782 = dma.vmem_to_hbm [thread:$0]  %s780, 128, %s777, %s766
        $region84: #{tpu_custom_call.1} parent=55 // pred_fallthru
          _
      $region56: #{tpu_custom_call.1} parent=5 // pred_fallthru
        _
      %p783 = scmp.le.s32.totalorder 2, %s26
      // Predicated region
      $region85: #{tpu_custom_call.1} parent=5 // pred_check
        %p784 = pneg %p783
      $region86: #{tpu_custom_call.1} parent=5 // pred_check_branch
        %786 = sbr.rel (%p784) target = $region88
      $region87: #{tpu_custom_call.1} parent=5 // pred_region
        %s787 = ssub.s32 %s26, 2
        // Predicated region
        $region89: #{tpu_custom_call.1} parent=87 // pred_check
          %p788 = pneg %p259
        $region90: #{tpu_custom_call.1} parent=87 // pred_check_branch
          %790 = sbr.rel (%p788) target = $region92
        $region91: #{tpu_custom_call.1} parent=87 // pred_region
          %s791 = sand.u32 %s244, 1
          %s792 = scalar_lea.sflag [#allocation4], %s791
          %s793 = sand.u32 %s244, 1
          %s794 = smul.addr %s793, 8
          %s795 = scalar_lea.vmem [#allocation13], %s794
          %796 = dma.done %s792, 128
        $region92: #{tpu_custom_call.1} parent=87 // pred_fallthru
          _
      $region88: #{tpu_custom_call.1} parent=5 // pred_fallthru
        _
    $region6: #{tpu_custom_call.1} parent=1 // loop_footer
      %s30 = sadd.s32 1, %s26
    $region7: #{tpu_custom_call.1} parent=1 // loop_footer_branch
      %25 = sbr.rel target = $region3
    $region8: #{tpu_custom_call.1} parent=1 // loop_exit
      _
    %797 = vsyncpa [#allocation3], 1
    %s798 = scalar_lea.sflag [#allocation3], 1
    %799 = vsyncpa %s798, 1
    %800 = vsyncpa [#allocation6], 1
    %s801 = scalar_lea.sflag [#allocation6], 1
    %802 = vsyncpa %s801, 1
    %803 = vsyncpa [#allocation9], 1
    %804 = vsyncpa [#allocation12], 1
    %805 = vsyncpa [#allocation4], 1
    %s806 = scalar_lea.sflag [#allocation4], 1
    %807 = vsyncpa %s806, 1

</llo_original>
